<compile_context>
chip_gen: v5e
topology: v5e:2x2
jax: 0.10.0
libtpu: 0.0.40
codegen_flags: <defaults>
</compile_context>

<pallas_src>
import functools

import jax
import jax.numpy as jnp
from jax import lax
from jax.experimental import pallas as pl
from jax.experimental.pallas import tpu as pltpu


_GATE_ORDER = (0, 1, 3, 2)            # PyTorch (i, f, g, o) -> kernel (i, f, o, g)
_GATE_PRESCALE = (0.5, 0.5, 0.5, 1.0)  # bake sigmoid(x) = 0.5*tanh(0.5x)+0.5 pre-scale (i,f,o)


def _round_up(x, m):
    return (x + m - 1) // m * m


def _prep_gates(w, H, Hp):
    """(..., 4H) PyTorch gate order -> (..., 4Hp): reorder to (i,f,o,g), bake the 0.5
    sigmoid pre-scale into i/f/o, zero-pad each gate block to Hp lanes."""
    blocks = []
    for k, s in zip(_GATE_ORDER, _GATE_PRESCALE):
        blk = w[..., k * H:(k + 1) * H] * s
        blocks.append(jnp.pad(blk, [(0, 0)] * (w.ndim - 1) + [(0, Hp - H)]))
    return jnp.concatenate(blocks, axis=-1)


def _vmem_ceiling_bytes():
    """~75% of this generation's physical VMEM (v7x: 64 MiB, v5e/v6e: 128 MiB)."""
    cap = 64 * 1024 * 1024
    try:
        cap = int(getattr(pltpu.get_tpu_info(), "vmem_capacity_bytes", cap))
    except Exception:  # no TPU info (e.g. interpret mode) -> conservative default
        pass
    return (cap * 3) // 4


def _lstm_recurrence_kernel(pre_ref, w_hh_ref, h_ref, c_ref, *, block_t, hidden_pad):
    """One grid step == `block_t` LSTM timesteps for one batch tile.

    pre_ref : (block_t, Bt, 4*Hp) bf16  x_t @ W_ih^T + bias, gate order (i,f,o,g),
                                        i/f/o columns pre-scaled by 0.5
    w_hh_ref: (Hp, 4*Hp)          bf16  recurrent weight (right-multiply form), VMEM resident
    h_ref   : (Bt, Hp)            f32   OUTPUT block; doubles as the h-state carrier
    c_ref   : (Bt, Hp)            f32   VMEM scratch carrying the cell state
    """
    Hp = hidden_pad

    @pl.when(pl.program_id(1) == 0)            # first time block of this batch tile
    def _init():
        h_ref[...] = jnp.zeros_like(h_ref)
        c_ref[...] = jnp.zeros_like(c_ref)

    def step(t, carry):
        # gates = pre_gates[t] + h @ W_hh^T   (bf16 MXU operands, f32 accumulation)
        gates = pre_ref[t].astype(jnp.float32) + jnp.dot(
            h_ref[...].astype(jnp.bfloat16), w_hh_ref[...],
            preferred_element_type=jnp.float32)
        # Single EUP pass over all 4 lane-aligned gate blocks:
        #   sigmoid(x) = 0.5*tanh(0.5x)+0.5  (0.5 pre-scale folded into i/f/o weights/bias)
        th = jnp.tanh(gates)
        ifo = 0.5 * th[:, :3 * Hp] + 0.5
        i_g = ifo[:, 0 * Hp:1 * Hp]
        f_g = ifo[:, 1 * Hp:2 * Hp]
        o_g = ifo[:, 2 * Hp:3 * Hp]
        g_g = th[:, 3 * Hp:4 * Hp]
        c_new = f_g * c_ref[...] + i_g * g_g
        c_ref[...] = c_new
        h_ref[...] = o_g * jnp.tanh(c_new)     # output block carries the recurrent h state
        return carry

    lax.fori_loop(0, block_t, step, 0, unroll=True)


@functools.partial(jax.jit, static_argnames=("block_t", "batch_tile"))
def lstm_model_forward(x, params, *, block_t=32, batch_tile=64):
    """x: (batch, seq, input_size) float32 — same convention as the PyTorch module."""
    w_ih, w_hh, b_ih, b_hh, fc_w, fc_b = (params[k] for k in
                                          ("w_ih", "w_hh", "b_ih", "b_hh", "fc_w", "fc_b"))
    B, S, I = x.shape
    H = w_hh.shape[1]
    Hp = _round_up(H, 128)                     # lane-aligned gate blocks
    Bt = min(_round_up(B, 8), batch_tile)      # sublane-aligned batch tile
    Bp = _round_up(B, Bt)                      # padded batch (multiple of the batch tile)

    # ---- generation-aware VMEM budget; shrink the time block if it would not fit ----
    ceiling = _vmem_ceiling_bytes()

    def est_bytes(t):
        return (2 * t * Bt * 4 * Hp * 2        # double-buffered bf16 pre-gate slab
                + Hp * 4 * Hp * 2              # single-buffered bf16 W_hh (resident)
                + 3 * Bt * Hp * 4)             # h output block (+writeback) and c scratch

    T = max(1, min(S, block_t))
    while T > 1 and est_bytes(T) > ceiling:
        T //= 2
    S_pad = _round_up(S, T)
    vmem_limit = int(min(max(est_bytes(T) * 3 // 2, 32 * 1024 * 1024), ceiling))

    # ---- weights: reorder/scale/pad gate columns; bf16 for the MXU-resident W_hh ----
    w_ih_p = _prep_gates(jnp.transpose(w_ih), H, Hp)                   # (I, 4Hp)  f32
    w_hh_p = jnp.pad(_prep_gates(jnp.transpose(w_hh), H, Hp),
                     ((0, Hp - H), (0, 0))).astype(jnp.bfloat16)       # (Hp, 4Hp) bf16
    b_p = _prep_gates(b_ih + b_hh, H, Hp)                              # (4Hp,)    f32

    # ---- hoisted input projection: one big (B*S, I) @ (I, 4Hp) matmul + bias ----
    pre = jnp.einsum('bsi,ig->bsg', x, w_ih_p,
                     preferred_element_type=jnp.float32) + b_p        # (B, S, 4Hp)
    pre = jnp.transpose(pre, (1, 0, 2))                               # time-major (S, B, 4Hp)
    # Pad batch (extra rows are discarded) and pad time at the FRONT with zero pre-gates:
    # zero pre-gates keep h = c = 0, so leading padding and padded gate columns are inert.
    pre = jnp.pad(pre, ((S_pad - S, 0), (0, Bp - B), (0, 0)))
    pre = pre.astype(jnp.bfloat16)                                    # halve HBM DMA + VMEM

    kernel = functools.partial(_lstm_recurrence_kernel, block_t=T, hidden_pad=Hp)

    h_last = pl.pallas_call(
        kernel,
        out_shape=jax.ShapeDtypeStruct((Bp, Hp), jnp.float32),
        grid_spec=pltpu.PrefetchScalarGridSpec(
            num_scalar_prefetch=0,
            grid=(Bp // Bt, S_pad // T),                              # (batch tiles, time)
            in_specs=[
                # streamed pre-gate slab: T timesteps for this batch tile
                pl.BlockSpec((T, Bt, 4 * Hp), lambda b, t: (t, b, 0)),
                # W_hh^T: constant index map -> resident; single buffer (never re-DMA'd)
                pl.BlockSpec((Hp, 4 * Hp), lambda b, t: (0, 0),
                             pipeline_mode=pl.Buffered(1)),
            ],
            # output block doubles as the h-state carrier (resident across the time axis)
            out_specs=pl.BlockSpec((Bt, Hp), lambda b, t: (b, 0)),
            scratch_shapes=[pltpu.VMEM((Bt, Hp), jnp.float32)],       # c state
        ),
        compiler_params=pltpu.CompilerParams(
            # batch tiles are independent (megacore-shardable on v7x); time is sequential
            dimension_semantics=("parallel", "arbitrary"),
            vmem_limit_bytes=vmem_limit,
        ),
    )(pre, w_hh_p)

    # Final FC on the un-padded last hidden state — tiny lane-width-1 matmul, done in XLA.
    h = h_last[:B, :H]
    out = h @ jnp.transpose(fc_w) + fc_b                              # (B, 1)
    return jnp.squeeze(out)                                           # matches out.squeeze()


def lstm_model_reference(x, params):
    """Pure-JAX f32 reference of the same forward (for the correctness check)."""
    w_ih, w_hh, b_ih, b_hh, fc_w, fc_b = (params[k] for k in
                                          ("w_ih", "w_hh", "b_ih", "b_hh", "fc_w", "fc_b"))
    B, S, I = x.shape
    H = w_hh.shape[1]
    h = jnp.zeros((B, H), jnp.float32)
    c = jnp.zeros((B, H), jnp.float32)

    def step(carry, x_t):
        h, c = carry
        gates = x_t @ w_ih.T + h @ w_hh.T + b_ih + b_hh
        i_g = jax.nn.sigmoid(gates[:, 0 * H:1 * H])
        f_g = jax.nn.sigmoid(gates[:, 1 * H:2 * H])
        g_g = jnp.tanh(gates[:, 2 * H:3 * H])
        o_g = jax.nn.sigmoid(gates[:, 3 * H:4 * H])
        c = f_g * c + i_g * g_g
        h = o_g * jnp.tanh(c)
        return (h, c), None

    (h, _), _ = jax.lax.scan(step, (h, c), jnp.transpose(x, (1, 0, 2)))
    return jnp.squeeze(h @ fc_w.T + fc_b)


def init_params(key, input_size, hidden_size):
    """Deterministic synthetic init (uniform +-1/sqrt(H), like PyTorch's default)."""
    ks = jax.random.split(key, 6)
    bound = 1.0 / jnp.sqrt(hidden_size)
    u = lambda k, shape: jax.random.uniform(k, shape, jnp.float32, -bound, bound)
    return {
        "w_ih": u(ks[0], (4 * hidden_size, input_size)),
        "w_hh": u(ks[1], (4 * hidden_size, hidden_size)),
        "b_ih": u(ks[2], (4 * hidden_size,)),
        "b_hh": u(ks[3], (4 * hidden_size,)),
        "fc_w": u(ks[4], (1, hidden_size)),
        "fc_b": u(ks[5], (1,)),
    }


if __name__ == "__main__":
    batch, seq, input_size, hidden = 2, 8, 4, 32

    key = jax.random.PRNGKey(0)
    k_x, k_p = jax.random.split(key)
    x = jax.random.normal(k_x, (batch, seq, input_size), jnp.float32)
    params = init_params(k_p, input_size, hidden)

    out = jax.block_until_ready(lstm_model_forward(x, params))
    ref = jax.block_until_ready(lstm_model_reference(x, params))

    assert out.shape == (batch,), out.shape
    # bf16 MXU operands / bf16 pre-gate slab -> slightly loosened tolerance vs f32 reference.
    assert jnp.allclose(out, ref, rtol=5e-2, atol=5e-2), (out, ref)
    print("KERNEL_OK")
</pallas_src>

<mosaic_0001>
module attributes {stable_mosaic.version = 11 : i64} {
  func.func @_lstm_recurrence_kernel(%arg0: i32, %arg1: i32, %arg2: memref<8x8x512xbf16, #tpu.memory_space<vmem>>, %arg3: memref<128x512xbf16, #tpu.memory_space<vmem>>, %arg4: memref<8x128xf32, #tpu.memory_space<vmem>>, %arg5: memref<8x128xf32, #tpu.memory_space<vmem>>) attributes {dimension_semantics = [#tpu.dimension_semantics<parallel>, #tpu.dimension_semantics<arbitrary>], iteration_bounds = array<i64: 1, 1>, scalar_prefetch = 0 : i64, scratch_operands = 1 : i64, tpu.core_type = #tpu.core_type<tc>, window_params = [{transform_indices = @transform_0, window_bounds = array<i64: 8, 8, 512>}, {pipeline_mode = #tpu.pipeline_mode<synchronous>, transform_indices = @transform_1, window_bounds = array<i64: 128, 512>}, {transform_indices = @transform_2, window_bounds = array<i64: 8, 128>}]} {
    %c0_i32 = arith.constant 0 : i32
    %0 = arith.cmpi eq, %arg1, %c0_i32 : i32
    %1 = arith.extui %0 : i1 to i32
    %c0_i32_0 = arith.constant 0 : i32
    %2 = arith.cmpi ne, %1, %c0_i32_0 : i32
    scf.if %2 {
      %cst_120 = arith.constant 0.000000e+00 : f32
      %219 = vector.broadcast %cst_120 : f32 to vector<8x128xf32>
      %c0_121 = arith.constant 0 : index
      %c0_122 = arith.constant 0 : index
      %220 = vector.load %arg4[%c0_121, %c0_122] : memref<8x128xf32, #tpu.memory_space<vmem>>, vector<8x128xf32>
      tpu.vector_store %arg4[%c0_121, %c0_122], %219 {strides = array<i32>} : memref<8x128xf32, #tpu.memory_space<vmem>>, vector<8x128xf32>,
      %cst_123 = arith.constant 0.000000e+00 : f32
      %221 = vector.broadcast %cst_123 : f32 to vector<8x128xf32>
      %c0_124 = arith.constant 0 : index
      %c0_125 = arith.constant 0 : index
      %222 = vector.load %arg5[%c0_124, %c0_125] : memref<8x128xf32, #tpu.memory_space<vmem>>, vector<8x128xf32>
      tpu.vector_store %arg5[%c0_124, %c0_125], %221 {strides = array<i32>} : memref<8x128xf32, #tpu.memory_space<vmem>>, vector<8x128xf32>,
    } else {
    }
    %c0_i32_1 = arith.constant 0 : i32
    %3 = arith.index_cast %c0_i32_1 : i32 to index
    %c0 = arith.constant 0 : index
    %c0_2 = arith.constant 0 : index
    %4 = vector.load %arg2[%3, %c0, %c0_2] : memref<8x8x512xbf16, #tpu.memory_space<vmem>>, vector<1x8x512xbf16>
    %5 = vector.shape_cast %4 : vector<1x8x512xbf16> to vector<8x512xbf16>
    %6 = arith.extf %5 : vector<8x512xbf16> to vector<8x512xf32>
    %c0_3 = arith.constant 0 : index
    %c0_4 = arith.constant 0 : index
    %7 = vector.load %arg4[%c0_3, %c0_4] : memref<8x128xf32, #tpu.memory_space<vmem>>, vector<8x128xf32>
    %8 = arith.truncf %7 : vector<8x128xf32> to vector<8x128xbf16>
    %c0_5 = arith.constant 0 : index
    %c0_6 = arith.constant 0 : index
    %9 = vector.load %arg3[%c0_5, %c0_6] : memref<128x512xbf16, #tpu.memory_space<vmem>>, vector<128x512xbf16>
    %cst = arith.constant dense<0.000000e+00> : vector<8x512xf32>
    %10 = tpu.matmul %8, %9, %cst {dimension_numbers = #tpu.dot_dimension_numbers<[1], [0], [0], [1], [0, 0, 1, 1], [], []>} : vector<8x128xbf16>, vector<128x512xbf16>, vector<8x512xf32> -> vector<8x512xf32>
    %11 = arith.addf %6, %10 : vector<8x512xf32>
    %12 = math.tanh %11 : vector<8x512xf32>
    %13 = vector.extract_strided_slice %12 {offsets = [0, 0], sizes = [8, 384], strides = [1, 1]} : vector<8x512xf32> to vector<8x384xf32>
    %cst_7 = arith.constant 5.000000e-01 : f32
    %14 = vector.broadcast %cst_7 : f32 to vector<8x384xf32>
    %15 = arith.mulf %14, %13 : vector<8x384xf32>
    %cst_8 = arith.constant 5.000000e-01 : f32
    %16 = vector.broadcast %cst_8 : f32 to vector<8x384xf32>
    %17 = arith.addf %15, %16 : vector<8x384xf32>
    %18 = vector.extract_strided_slice %17 {offsets = [0, 0], sizes = [8, 128], strides = [1, 1]} : vector<8x384xf32> to vector<8x128xf32>
    %19 = vector.extract_strided_slice %17 {offsets = [0, 128], sizes = [8, 128], strides = [1, 1]} : vector<8x384xf32> to vector<8x128xf32>
    %20 = vector.extract_strided_slice %17 {offsets = [0, 256], sizes = [8, 128], strides = [1, 1]} : vector<8x384xf32> to vector<8x128xf32>
    %21 = vector.extract_strided_slice %12 {offsets = [0, 384], sizes = [8, 128], strides = [1, 1]} : vector<8x512xf32> to vector<8x128xf32>
    %c0_9 = arith.constant 0 : index
    %c0_10 = arith.constant 0 : index
    %22 = vector.load %arg5[%c0_9, %c0_10] : memref<8x128xf32, #tpu.memory_space<vmem>>, vector<8x128xf32>
    %23 = arith.mulf %19, %22 : vector<8x128xf32>
    %24 = arith.mulf %18, %21 : vector<8x128xf32>
    %25 = arith.addf %23, %24 : vector<8x128xf32>
    %c0_11 = arith.constant 0 : index
    %c0_12 = arith.constant 0 : index
    %26 = vector.load %arg5[%c0_11, %c0_12] : memref<8x128xf32, #tpu.memory_space<vmem>>, vector<8x128xf32>
    tpu.vector_store %arg5[%c0_11, %c0_12], %25 {strides = array<i32>} : memref<8x128xf32, #tpu.memory_space<vmem>>, vector<8x128xf32>,
    %27 = math.tanh %25 : vector<8x128xf32>
    %28 = arith.mulf %20, %27 : vector<8x128xf32>
    %c0_13 = arith.constant 0 : index
    %c0_14 = arith.constant 0 : index
    %29 = vector.load %arg4[%c0_13, %c0_14] : memref<8x128xf32, #tpu.memory_space<vmem>>, vector<8x128xf32>
    tpu.vector_store %arg4[%c0_13, %c0_14], %28 {strides = array<i32>} : memref<8x128xf32, #tpu.memory_space<vmem>>, vector<8x128xf32>,
    %c1_i32 = arith.constant 1 : i32
    %30 = arith.index_cast %c1_i32 : i32 to index
    %c0_15 = arith.constant 0 : index
    %c0_16 = arith.constant 0 : index
    %31 = vector.load %arg2[%30, %c0_15, %c0_16] : memref<8x8x512xbf16, #tpu.memory_space<vmem>>, vector<1x8x512xbf16>
    %32 = vector.shape_cast %31 : vector<1x8x512xbf16> to vector<8x512xbf16>
    %33 = arith.extf %32 : vector<8x512xbf16> to vector<8x512xf32>
    %c0_17 = arith.constant 0 : index
    %c0_18 = arith.constant 0 : index
    %34 = vector.load %arg4[%c0_17, %c0_18] : memref<8x128xf32, #tpu.memory_space<vmem>>, vector<8x128xf32>
    %35 = arith.truncf %34 : vector<8x128xf32> to vector<8x128xbf16>
    %c0_19 = arith.constant 0 : index
    %c0_20 = arith.constant 0 : index
    %36 = vector.load %arg3[%c0_19, %c0_20] : memref<128x512xbf16, #tpu.memory_space<vmem>>, vector<128x512xbf16>
    %cst_21 = arith.constant dense<0.000000e+00> : vector<8x512xf32>
    %37 = tpu.matmul %35, %36, %cst_21 {dimension_numbers = #tpu.dot_dimension_numbers<[1], [0], [0], [1], [0, 0, 1, 1], [], []>} : vector<8x128xbf16>, vector<128x512xbf16>, vector<8x512xf32> -> vector<8x512xf32>
    %38 = arith.addf %33, %37 : vector<8x512xf32>
    %39 = math.tanh %38 : vector<8x512xf32>
    %40 = vector.extract_strided_slice %39 {offsets = [0, 0], sizes = [8, 384], strides = [1, 1]} : vector<8x512xf32> to vector<8x384xf32>
    %cst_22 = arith.constant 5.000000e-01 : f32
    %41 = vector.broadcast %cst_22 : f32 to vector<8x384xf32>
    %42 = arith.mulf %41, %40 : vector<8x384xf32>
    %cst_23 = arith.constant 5.000000e-01 : f32
    %43 = vector.broadcast %cst_23 : f32 to vector<8x384xf32>
    %44 = arith.addf %42, %43 : vector<8x384xf32>
    %45 = vector.extract_strided_slice %44 {offsets = [0, 0], sizes = [8, 128], strides = [1, 1]} : vector<8x384xf32> to vector<8x128xf32>
    %46 = vector.extract_strided_slice %44 {offsets = [0, 128], sizes = [8, 128], strides = [1, 1]} : vector<8x384xf32> to vector<8x128xf32>
    %47 = vector.extract_strided_slice %44 {offsets = [0, 256], sizes = [8, 128], strides = [1, 1]} : vector<8x384xf32> to vector<8x128xf32>
    %48 = vector.extract_strided_slice %39 {offsets = [0, 384], sizes = [8, 128], strides = [1, 1]} : vector<8x512xf32> to vector<8x128xf32>
    %c0_24 = arith.constant 0 : index
    %c0_25 = arith.constant 0 : index
    %49 = vector.load %arg5[%c0_24, %c0_25] : memref<8x128xf32, #tpu.memory_space<vmem>>, vector<8x128xf32>
    %50 = arith.mulf %46, %49 : vector<8x128xf32>
    %51 = arith.mulf %45, %48 : vector<8x128xf32>
    %52 = arith.addf %50, %51 : vector<8x128xf32>
    %c0_26 = arith.constant 0 : index
    %c0_27 = arith.constant 0 : index
    %53 = vector.load %arg5[%c0_26, %c0_27] : memref<8x128xf32, #tpu.memory_space<vmem>>, vector<8x128xf32>
    tpu.vector_store %arg5[%c0_26, %c0_27], %52 {strides = array<i32>} : memref<8x128xf32, #tpu.memory_space<vmem>>, vector<8x128xf32>,
    %54 = math.tanh %52 : vector<8x128xf32>
    %55 = arith.mulf %47, %54 : vector<8x128xf32>
    %c0_28 = arith.constant 0 : index
    %c0_29 = arith.constant 0 : index
    %56 = vector.load %arg4[%c0_28, %c0_29] : memref<8x128xf32, #tpu.memory_space<vmem>>, vector<8x128xf32>
    tpu.vector_store %arg4[%c0_28, %c0_29], %55 {strides = array<i32>} : memref<8x128xf32, #tpu.memory_space<vmem>>, vector<8x128xf32>,
    %c2_i32 = arith.constant 2 : i32
    %57 = arith.index_cast %c2_i32 : i32 to index
    %c0_30 = arith.constant 0 : index
    %c0_31 = arith.constant 0 : index
    %58 = vector.load %arg2[%57, %c0_30, %c0_31] : memref<8x8x512xbf16, #tpu.memory_space<vmem>>, vector<1x8x512xbf16>
    %59 = vector.shape_cast %58 : vector<1x8x512xbf16> to vector<8x512xbf16>
    %60 = arith.extf %59 : vector<8x512xbf16> to vector<8x512xf32>
    %c0_32 = arith.constant 0 : index
    %c0_33 = arith.constant 0 : index
    %61 = vector.load %arg4[%c0_32, %c0_33] : memref<8x128xf32, #tpu.memory_space<vmem>>, vector<8x128xf32>
    %62 = arith.truncf %61 : vector<8x128xf32> to vector<8x128xbf16>
    %c0_34 = arith.constant 0 : index
    %c0_35 = arith.constant 0 : index
    %63 = vector.load %arg3[%c0_34, %c0_35] : memref<128x512xbf16, #tpu.memory_space<vmem>>, vector<128x512xbf16>
    %cst_36 = arith.constant dense<0.000000e+00> : vector<8x512xf32>
    %64 = tpu.matmul %62, %63, %cst_36 {dimension_numbers = #tpu.dot_dimension_numbers<[1], [0], [0], [1], [0, 0, 1, 1], [], []>} : vector<8x128xbf16>, vector<128x512xbf16>, vector<8x512xf32> -> vector<8x512xf32>
    %65 = arith.addf %60, %64 : vector<8x512xf32>
    %66 = math.tanh %65 : vector<8x512xf32>
    %67 = vector.extract_strided_slice %66 {offsets = [0, 0], sizes = [8, 384], strides = [1, 1]} : vector<8x512xf32> to vector<8x384xf32>
    %cst_37 = arith.constant 5.000000e-01 : f32
    %68 = vector.broadcast %cst_37 : f32 to vector<8x384xf32>
    %69 = arith.mulf %68, %67 : vector<8x384xf32>
    %cst_38 = arith.constant 5.000000e-01 : f32
    %70 = vector.broadcast %cst_38 : f32 to vector<8x384xf32>
    %71 = arith.addf %69, %70 : vector<8x384xf32>
    %72 = vector.extract_strided_slice %71 {offsets = [0, 0], sizes = [8, 128], strides = [1, 1]} : vector<8x384xf32> to vector<8x128xf32>
    %73 = vector.extract_strided_slice %71 {offsets = [0, 128], sizes = [8, 128], strides = [1, 1]} : vector<8x384xf32> to vector<8x128xf32>
    %74 = vector.extract_strided_slice %71 {offsets = [0, 256], sizes = [8, 128], strides = [1, 1]} : vector<8x384xf32> to vector<8x128xf32>
    %75 = vector.extract_strided_slice %66 {offsets = [0, 384], sizes = [8, 128], strides = [1, 1]} : vector<8x512xf32> to vector<8x128xf32>
    %c0_39 = arith.constant 0 : index
    %c0_40 = arith.constant 0 : index
    %76 = vector.load %arg5[%c0_39, %c0_40] : memref<8x128xf32, #tpu.memory_space<vmem>>, vector<8x128xf32>
    %77 = arith.mulf %73, %76 : vector<8x128xf32>
    %78 = arith.mulf %72, %75 : vector<8x128xf32>
    %79 = arith.addf %77, %78 : vector<8x128xf32>
    %c0_41 = arith.constant 0 : index
    %c0_42 = arith.constant 0 : index
    %80 = vector.load %arg5[%c0_41, %c0_42] : memref<8x128xf32, #tpu.memory_space<vmem>>, vector<8x128xf32>
    tpu.vector_store %arg5[%c0_41, %c0_42], %79 {strides = array<i32>} : memref<8x128xf32, #tpu.memory_space<vmem>>, vector<8x128xf32>,
    %81 = math.tanh %79 : vector<8x128xf32>
    %82 = arith.mulf %74, %81 : vector<8x128xf32>
    %c0_43 = arith.constant 0 : index
    %c0_44 = arith.constant 0 : index
    %83 = vector.load %arg4[%c0_43, %c0_44] : memref<8x128xf32, #tpu.memory_space<vmem>>, vector<8x128xf32>
    tpu.vector_store %arg4[%c0_43, %c0_44], %82 {strides = array<i32>} : memref<8x128xf32, #tpu.memory_space<vmem>>, vector<8x128xf32>,
    %c3_i32 = arith.constant 3 : i32
    %84 = arith.index_cast %c3_i32 : i32 to index
    %c0_45 = arith.constant 0 : index
    %c0_46 = arith.constant 0 : index
    %85 = vector.load %arg2[%84, %c0_45, %c0_46] : memref<8x8x512xbf16, #tpu.memory_space<vmem>>, vector<1x8x512xbf16>
    %86 = vector.shape_cast %85 : vector<1x8x512xbf16> to vector<8x512xbf16>
    %87 = arith.extf %86 : vector<8x512xbf16> to vector<8x512xf32>
    %c0_47 = arith.constant 0 : index
    %c0_48 = arith.constant 0 : index
    %88 = vector.load %arg4[%c0_47, %c0_48] : memref<8x128xf32, #tpu.memory_space<vmem>>, vector<8x128xf32>
    %89 = arith.truncf %88 : vector<8x128xf32> to vector<8x128xbf16>
    %c0_49 = arith.constant 0 : index
    %c0_50 = arith.constant 0 : index
    %90 = vector.load %arg3[%c0_49, %c0_50] : memref<128x512xbf16, #tpu.memory_space<vmem>>, vector<128x512xbf16>
    %cst_51 = arith.constant dense<0.000000e+00> : vector<8x512xf32>
    %91 = tpu.matmul %89, %90, %cst_51 {dimension_numbers = #tpu.dot_dimension_numbers<[1], [0], [0], [1], [0, 0, 1, 1], [], []>} : vector<8x128xbf16>, vector<128x512xbf16>, vector<8x512xf32> -> vector<8x512xf32>
    %92 = arith.addf %87, %91 : vector<8x512xf32>
    %93 = math.tanh %92 : vector<8x512xf32>
    %94 = vector.extract_strided_slice %93 {offsets = [0, 0], sizes = [8, 384], strides = [1, 1]} : vector<8x512xf32> to vector<8x384xf32>
    %cst_52 = arith.constant 5.000000e-01 : f32
    %95 = vector.broadcast %cst_52 : f32 to vector<8x384xf32>
    %96 = arith.mulf %95, %94 : vector<8x384xf32>
    %cst_53 = arith.constant 5.000000e-01 : f32
    %97 = vector.broadcast %cst_53 : f32 to vector<8x384xf32>
    %98 = arith.addf %96, %97 : vector<8x384xf32>
    %99 = vector.extract_strided_slice %98 {offsets = [0, 0], sizes = [8, 128], strides = [1, 1]} : vector<8x384xf32> to vector<8x128xf32>
    %100 = vector.extract_strided_slice %98 {offsets = [0, 128], sizes = [8, 128], strides = [1, 1]} : vector<8x384xf32> to vector<8x128xf32>
    %101 = vector.extract_strided_slice %98 {offsets = [0, 256], sizes = [8, 128], strides = [1, 1]} : vector<8x384xf32> to vector<8x128xf32>
    %102 = vector.extract_strided_slice %93 {offsets = [0, 384], sizes = [8, 128], strides = [1, 1]} : vector<8x512xf32> to vector<8x128xf32>
    %c0_54 = arith.constant 0 : index
    %c0_55 = arith.constant 0 : index
    %103 = vector.load %arg5[%c0_54, %c0_55] : memref<8x128xf32, #tpu.memory_space<vmem>>, vector<8x128xf32>
    %104 = arith.mulf %100, %103 : vector<8x128xf32>
    %105 = arith.mulf %99, %102 : vector<8x128xf32>
    %106 = arith.addf %104, %105 : vector<8x128xf32>
    %c0_56 = arith.constant 0 : index
    %c0_57 = arith.constant 0 : index
    %107 = vector.load %arg5[%c0_56, %c0_57] : memref<8x128xf32, #tpu.memory_space<vmem>>, vector<8x128xf32>
    tpu.vector_store %arg5[%c0_56, %c0_57], %106 {strides = array<i32>} : memref<8x128xf32, #tpu.memory_space<vmem>>, vector<8x128xf32>,
    %108 = math.tanh %106 : vector<8x128xf32>
    %109 = arith.mulf %101, %108 : vector<8x128xf32>
    %c0_58 = arith.constant 0 : index
    %c0_59 = arith.constant 0 : index
    %110 = vector.load %arg4[%c0_58, %c0_59] : memref<8x128xf32, #tpu.memory_space<vmem>>, vector<8x128xf32>
    tpu.vector_store %arg4[%c0_58, %c0_59], %109 {strides = array<i32>} : memref<8x128xf32, #tpu.memory_space<vmem>>, vector<8x128xf32>,
    %c4_i32 = arith.constant 4 : i32
    %111 = arith.index_cast %c4_i32 : i32 to index
    %c0_60 = arith.constant 0 : index
    %c0_61 = arith.constant 0 : index
    %112 = vector.load %arg2[%111, %c0_60, %c0_61] : memref<8x8x512xbf16, #tpu.memory_space<vmem>>, vector<1x8x512xbf16>
    %113 = vector.shape_cast %112 : vector<1x8x512xbf16> to vector<8x512xbf16>
    %114 = arith.extf %113 : vector<8x512xbf16> to vector<8x512xf32>
    %c0_62 = arith.constant 0 : index
    %c0_63 = arith.constant 0 : index
    %115 = vector.load %arg4[%c0_62, %c0_63] : memref<8x128xf32, #tpu.memory_space<vmem>>, vector<8x128xf32>
    %116 = arith.truncf %115 : vector<8x128xf32> to vector<8x128xbf16>
    %c0_64 = arith.constant 0 : index
    %c0_65 = arith.constant 0 : index
    %117 = vector.load %arg3[%c0_64, %c0_65] : memref<128x512xbf16, #tpu.memory_space<vmem>>, vector<128x512xbf16>
    %cst_66 = arith.constant dense<0.000000e+00> : vector<8x512xf32>
    %118 = tpu.matmul %116, %117, %cst_66 {dimension_numbers = #tpu.dot_dimension_numbers<[1], [0], [0], [1], [0, 0, 1, 1], [], []>} : vector<8x128xbf16>, vector<128x512xbf16>, vector<8x512xf32> -> vector<8x512xf32>
    %119 = arith.addf %114, %118 : vector<8x512xf32>
    %120 = math.tanh %119 : vector<8x512xf32>
    %121 = vector.extract_strided_slice %120 {offsets = [0, 0], sizes = [8, 384], strides = [1, 1]} : vector<8x512xf32> to vector<8x384xf32>
    %cst_67 = arith.constant 5.000000e-01 : f32
    %122 = vector.broadcast %cst_67 : f32 to vector<8x384xf32>
    %123 = arith.mulf %122, %121 : vector<8x384xf32>
    %cst_68 = arith.constant 5.000000e-01 : f32
    %124 = vector.broadcast %cst_68 : f32 to vector<8x384xf32>
    %125 = arith.addf %123, %124 : vector<8x384xf32>
    %126 = vector.extract_strided_slice %125 {offsets = [0, 0], sizes = [8, 128], strides = [1, 1]} : vector<8x384xf32> to vector<8x128xf32>
    %127 = vector.extract_strided_slice %125 {offsets = [0, 128], sizes = [8, 128], strides = [1, 1]} : vector<8x384xf32> to vector<8x128xf32>
    %128 = vector.extract_strided_slice %125 {offsets = [0, 256], sizes = [8, 128], strides = [1, 1]} : vector<8x384xf32> to vector<8x128xf32>
    %129 = vector.extract_strided_slice %120 {offsets = [0, 384], sizes = [8, 128], strides = [1, 1]} : vector<8x512xf32> to vector<8x128xf32>
    %c0_69 = arith.constant 0 : index
    %c0_70 = arith.constant 0 : index
    %130 = vector.load %arg5[%c0_69, %c0_70] : memref<8x128xf32, #tpu.memory_space<vmem>>, vector<8x128xf32>
    %131 = arith.mulf %127, %130 : vector<8x128xf32>
    %132 = arith.mulf %126, %129 : vector<8x128xf32>
    %133 = arith.addf %131, %132 : vector<8x128xf32>
    %c0_71 = arith.constant 0 : index
    %c0_72 = arith.constant 0 : index
    %134 = vector.load %arg5[%c0_71, %c0_72] : memref<8x128xf32, #tpu.memory_space<vmem>>, vector<8x128xf32>
    tpu.vector_store %arg5[%c0_71, %c0_72], %133 {strides = array<i32>} : memref<8x128xf32, #tpu.memory_space<vmem>>, vector<8x128xf32>,
    %135 = math.tanh %133 : vector<8x128xf32>
    %136 = arith.mulf %128, %135 : vector<8x128xf32>
    %c0_73 = arith.constant 0 : index
    %c0_74 = arith.constant 0 : index
    %137 = vector.load %arg4[%c0_73, %c0_74] : memref<8x128xf32, #tpu.memory_space<vmem>>, vector<8x128xf32>
    tpu.vector_store %arg4[%c0_73, %c0_74], %136 {strides = array<i32>} : memref<8x128xf32, #tpu.memory_space<vmem>>, vector<8x128xf32>,
    %c5_i32 = arith.constant 5 : i32
    %138 = arith.index_cast %c5_i32 : i32 to index
    %c0_75 = arith.constant 0 : index
    %c0_76 = arith.constant 0 : index
    %139 = vector.load %arg2[%138, %c0_75, %c0_76] : memref<8x8x512xbf16, #tpu.memory_space<vmem>>, vector<1x8x512xbf16>
    %140 = vector.shape_cast %139 : vector<1x8x512xbf16> to vector<8x512xbf16>
    %141 = arith.extf %140 : vector<8x512xbf16> to vector<8x512xf32>
    %c0_77 = arith.constant 0 : index
    %c0_78 = arith.constant 0 : index
    %142 = vector.load %arg4[%c0_77, %c0_78] : memref<8x128xf32, #tpu.memory_space<vmem>>, vector<8x128xf32>
    %143 = arith.truncf %142 : vector<8x128xf32> to vector<8x128xbf16>
    %c0_79 = arith.constant 0 : index
    %c0_80 = arith.constant 0 : index
    %144 = vector.load %arg3[%c0_79, %c0_80] : memref<128x512xbf16, #tpu.memory_space<vmem>>, vector<128x512xbf16>
    %cst_81 = arith.constant dense<0.000000e+00> : vector<8x512xf32>
    %145 = tpu.matmul %143, %144, %cst_81 {dimension_numbers = #tpu.dot_dimension_numbers<[1], [0], [0], [1], [0, 0, 1, 1], [], []>} : vector<8x128xbf16>, vector<128x512xbf16>, vector<8x512xf32> -> vector<8x512xf32>
    %146 = arith.addf %141, %145 : vector<8x512xf32>
    %147 = math.tanh %146 : vector<8x512xf32>
    %148 = vector.extract_strided_slice %147 {offsets = [0, 0], sizes = [8, 384], strides = [1, 1]} : vector<8x512xf32> to vector<8x384xf32>
    %cst_82 = arith.constant 5.000000e-01 : f32
    %149 = vector.broadcast %cst_82 : f32 to vector<8x384xf32>
    %150 = arith.mulf %149, %148 : vector<8x384xf32>
    %cst_83 = arith.constant 5.000000e-01 : f32
    %151 = vector.broadcast %cst_83 : f32 to vector<8x384xf32>
    %152 = arith.addf %150, %151 : vector<8x384xf32>
    %153 = vector.extract_strided_slice %152 {offsets = [0, 0], sizes = [8, 128], strides = [1, 1]} : vector<8x384xf32> to vector<8x128xf32>
    %154 = vector.extract_strided_slice %152 {offsets = [0, 128], sizes = [8, 128], strides = [1, 1]} : vector<8x384xf32> to vector<8x128xf32>
    %155 = vector.extract_strided_slice %152 {offsets = [0, 256], sizes = [8, 128], strides = [1, 1]} : vector<8x384xf32> to vector<8x128xf32>
    %156 = vector.extract_strided_slice %147 {offsets = [0, 384], sizes = [8, 128], strides = [1, 1]} : vector<8x512xf32> to vector<8x128xf32>
    %c0_84 = arith.constant 0 : index
    %c0_85 = arith.constant 0 : index
    %157 = vector.load %arg5[%c0_84, %c0_85] : memref<8x128xf32, #tpu.memory_space<vmem>>, vector<8x128xf32>
    %158 = arith.mulf %154, %157 : vector<8x128xf32>
    %159 = arith.mulf %153, %156 : vector<8x128xf32>
    %160 = arith.addf %158, %159 : vector<8x128xf32>
    %c0_86 = arith.constant 0 : index
    %c0_87 = arith.constant 0 : index
    %161 = vector.load %arg5[%c0_86, %c0_87] : memref<8x128xf32, #tpu.memory_space<vmem>>, vector<8x128xf32>
    tpu.vector_store %arg5[%c0_86, %c0_87], %160 {strides = array<i32>} : memref<8x128xf32, #tpu.memory_space<vmem>>, vector<8x128xf32>,
    %162 = math.tanh %160 : vector<8x128xf32>
    %163 = arith.mulf %155, %162 : vector<8x128xf32>
    %c0_88 = arith.constant 0 : index
    %c0_89 = arith.constant 0 : index
    %164 = vector.load %arg4[%c0_88, %c0_89] : memref<8x128xf32, #tpu.memory_space<vmem>>, vector<8x128xf32>
    tpu.vector_store %arg4[%c0_88, %c0_89], %163 {strides = array<i32>} : memref<8x128xf32, #tpu.memory_space<vmem>>, vector<8x128xf32>,
    %c6_i32 = arith.constant 6 : i32
    %165 = arith.index_cast %c6_i32 : i32 to index
    %c0_90 = arith.constant 0 : index
    %c0_91 = arith.constant 0 : index
    %166 = vector.load %arg2[%165, %c0_90, %c0_91] : memref<8x8x512xbf16, #tpu.memory_space<vmem>>, vector<1x8x512xbf16>
    %167 = vector.shape_cast %166 : vector<1x8x512xbf16> to vector<8x512xbf16>
    %168 = arith.extf %167 : vector<8x512xbf16> to vector<8x512xf32>
    %c0_92 = arith.constant 0 : index
    %c0_93 = arith.constant 0 : index
    %169 = vector.load %arg4[%c0_92, %c0_93] : memref<8x128xf32, #tpu.memory_space<vmem>>, vector<8x128xf32>
    %170 = arith.truncf %169 : vector<8x128xf32> to vector<8x128xbf16>
    %c0_94 = arith.constant 0 : index
    %c0_95 = arith.constant 0 : index
    %171 = vector.load %arg3[%c0_94, %c0_95] : memref<128x512xbf16, #tpu.memory_space<vmem>>, vector<128x512xbf16>
    %cst_96 = arith.constant dense<0.000000e+00> : vector<8x512xf32>
    %172 = tpu.matmul %170, %171, %cst_96 {dimension_numbers = #tpu.dot_dimension_numbers<[1], [0], [0], [1], [0, 0, 1, 1], [], []>} : vector<8x128xbf16>, vector<128x512xbf16>, vector<8x512xf32> -> vector<8x512xf32>
    %173 = arith.addf %168, %172 : vector<8x512xf32>
    %174 = math.tanh %173 : vector<8x512xf32>
    %175 = vector.extract_strided_slice %174 {offsets = [0, 0], sizes = [8, 384], strides = [1, 1]} : vector<8x512xf32> to vector<8x384xf32>
    %cst_97 = arith.constant 5.000000e-01 : f32
    %176 = vector.broadcast %cst_97 : f32 to vector<8x384xf32>
    %177 = arith.mulf %176, %175 : vector<8x384xf32>
    %cst_98 = arith.constant 5.000000e-01 : f32
    %178 = vector.broadcast %cst_98 : f32 to vector<8x384xf32>
    %179 = arith.addf %177, %178 : vector<8x384xf32>
    %180 = vector.extract_strided_slice %179 {offsets = [0, 0], sizes = [8, 128], strides = [1, 1]} : vector<8x384xf32> to vector<8x128xf32>
    %181 = vector.extract_strided_slice %179 {offsets = [0, 128], sizes = [8, 128], strides = [1, 1]} : vector<8x384xf32> to vector<8x128xf32>
    %182 = vector.extract_strided_slice %179 {offsets = [0, 256], sizes = [8, 128], strides = [1, 1]} : vector<8x384xf32> to vector<8x128xf32>
    %183 = vector.extract_strided_slice %174 {offsets = [0, 384], sizes = [8, 128], strides = [1, 1]} : vector<8x512xf32> to vector<8x128xf32>
    %c0_99 = arith.constant 0 : index
    %c0_100 = arith.constant 0 : index
    %184 = vector.load %arg5[%c0_99, %c0_100] : memref<8x128xf32, #tpu.memory_space<vmem>>, vector<8x128xf32>
    %185 = arith.mulf %181, %184 : vector<8x128xf32>
    %186 = arith.mulf %180, %183 : vector<8x128xf32>
    %187 = arith.addf %185, %186 : vector<8x128xf32>
    %c0_101 = arith.constant 0 : index
    %c0_102 = arith.constant 0 : index
    %188 = vector.load %arg5[%c0_101, %c0_102] : memref<8x128xf32, #tpu.memory_space<vmem>>, vector<8x128xf32>
    tpu.vector_store %arg5[%c0_101, %c0_102], %187 {strides = array<i32>} : memref<8x128xf32, #tpu.memory_space<vmem>>, vector<8x128xf32>,
    %189 = math.tanh %187 : vector<8x128xf32>
    %190 = arith.mulf %182, %189 : vector<8x128xf32>
    %c0_103 = arith.constant 0 : index
    %c0_104 = arith.constant 0 : index
    %191 = vector.load %arg4[%c0_103, %c0_104] : memref<8x128xf32, #tpu.memory_space<vmem>>, vector<8x128xf32>
    tpu.vector_store %arg4[%c0_103, %c0_104], %190 {strides = array<i32>} : memref<8x128xf32, #tpu.memory_space<vmem>>, vector<8x128xf32>,
    %c7_i32 = arith.constant 7 : i32
    %192 = arith.index_cast %c7_i32 : i32 to index
    %c0_105 = arith.constant 0 : index
    %c0_106 = arith.constant 0 : index
    %193 = vector.load %arg2[%192, %c0_105, %c0_106] : memref<8x8x512xbf16, #tpu.memory_space<vmem>>, vector<1x8x512xbf16>
    %194 = vector.shape_cast %193 : vector<1x8x512xbf16> to vector<8x512xbf16>
    %195 = arith.extf %194 : vector<8x512xbf16> to vector<8x512xf32>
    %c0_107 = arith.constant 0 : index
    %c0_108 = arith.constant 0 : index
    %196 = vector.load %arg4[%c0_107, %c0_108] : memref<8x128xf32, #tpu.memory_space<vmem>>, vector<8x128xf32>
    %197 = arith.truncf %196 : vector<8x128xf32> to vector<8x128xbf16>
    %c0_109 = arith.constant 0 : index
    %c0_110 = arith.constant 0 : index
    %198 = vector.load %arg3[%c0_109, %c0_110] : memref<128x512xbf16, #tpu.memory_space<vmem>>, vector<128x512xbf16>
    %cst_111 = arith.constant dense<0.000000e+00> : vector<8x512xf32>
    %199 = tpu.matmul %197, %198, %cst_111 {dimension_numbers = #tpu.dot_dimension_numbers<[1], [0], [0], [1], [0, 0, 1, 1], [], []>} : vector<8x128xbf16>, vector<128x512xbf16>, vector<8x512xf32> -> vector<8x512xf32>
    %200 = arith.addf %195, %199 : vector<8x512xf32>
    %201 = math.tanh %200 : vector<8x512xf32>
    %202 = vector.extract_strided_slice %201 {offsets = [0, 0], sizes = [8, 384], strides = [1, 1]} : vector<8x512xf32> to vector<8x384xf32>
    %cst_112 = arith.constant 5.000000e-01 : f32
    %203 = vector.broadcast %cst_112 : f32 to vector<8x384xf32>
    %204 = arith.mulf %203, %202 : vector<8x384xf32>
    %cst_113 = arith.constant 5.000000e-01 : f32
    %205 = vector.broadcast %cst_113 : f32 to vector<8x384xf32>
    %206 = arith.addf %204, %205 : vector<8x384xf32>
    %207 = vector.extract_strided_slice %206 {offsets = [0, 0], sizes = [8, 128], strides = [1, 1]} : vector<8x384xf32> to vector<8x128xf32>
    %208 = vector.extract_strided_slice %206 {offsets = [0, 128], sizes = [8, 128], strides = [1, 1]} : vector<8x384xf32> to vector<8x128xf32>
    %209 = vector.extract_strided_slice %206 {offsets = [0, 256], sizes = [8, 128], strides = [1, 1]} : vector<8x384xf32> to vector<8x128xf32>
    %210 = vector.extract_strided_slice %201 {offsets = [0, 384], sizes = [8, 128], strides = [1, 1]} : vector<8x512xf32> to vector<8x128xf32>
    %c0_114 = arith.constant 0 : index
    %c0_115 = arith.constant 0 : index
    %211 = vector.load %arg5[%c0_114, %c0_115] : memref<8x128xf32, #tpu.memory_space<vmem>>, vector<8x128xf32>
    %212 = arith.mulf %208, %211 : vector<8x128xf32>
    %213 = arith.mulf %207, %210 : vector<8x128xf32>
    %214 = arith.addf %212, %213 : vector<8x128xf32>
    %c0_116 = arith.constant 0 : index
    %c0_117 = arith.constant 0 : index
    %215 = vector.load %arg5[%c0_116, %c0_117] : memref<8x128xf32, #tpu.memory_space<vmem>>, vector<8x128xf32>
    tpu.vector_store %arg5[%c0_116, %c0_117], %214 {strides = array<i32>} : memref<8x128xf32, #tpu.memory_space<vmem>>, vector<8x128xf32>,
    %216 = math.tanh %214 : vector<8x128xf32>
    %217 = arith.mulf %209, %216 : vector<8x128xf32>
    %c0_118 = arith.constant 0 : index
    %c0_119 = arith.constant 0 : index
    %218 = vector.load %arg4[%c0_118, %c0_119] : memref<8x128xf32, #tpu.memory_space<vmem>>, vector<8x128xf32>
    tpu.vector_store %arg4[%c0_118, %c0_119], %217 {strides = array<i32>} : memref<8x128xf32, #tpu.memory_space<vmem>>, vector<8x128xf32>,
    %c8_i32 = arith.constant 8 : i32
    return
  }
  func.func @transform_0(%arg0: i32, %arg1: i32) -> (i32, i32, i32) {
    %c0_i32 = arith.constant 0 : i32
    %c0_i32_0 = arith.constant 0 : i32
    return %arg1, %arg0, %c0_i32 : i32, i32, i32
  }
  func.func @transform_1(%arg0: i32, %arg1: i32) -> (i32, i32) {
    %c0_i32 = arith.constant 0 : i32
    %c0_i32_0 = arith.constant 0 : i32
    %c0_i32_1 = arith.constant 0 : i32
    return %c0_i32, %c0_i32_0 : i32, i32
  }
  func.func @transform_2(%arg0: i32, %arg1: i32) -> (i32, i32) {
    %c0_i32 = arith.constant 0 : i32
    %c0_i32_0 = arith.constant 0 : i32
    return %arg0, %c0_i32 : i32, i32
  }
}

</mosaic_0001>

<llo_original>
// kernel: lstm_model_forward.1
$region0: #{lstm_model_forward.1}
  #allocation0 [shape = 'u32[]', space=smem, size = 0x4, offset = 0x4, fixed_abs, tag = 'smem constant byte address 0x4 - core index']
  #allocation1 [shape = 'u32[72,128]{1,0:T(1,128)}', space=vmem, size = 0x9000, scoped, tag = 'internal scratch']
  #allocation2 [shape = 'f32[8,128]{1,0:T(8,128)}', space=vmem, size = 0x1000, scoped, tag = 'scratch operand']
  %s0 = inlined_call_operand.vmem [shape: bf16[8,8,512], index: 0, kind: input, shape index: {}]
  %s1 = inlined_call_operand.vmem [shape: bf16[128,512], index: 1, kind: input, shape index: {}]
  %s2 = inlined_call_operand.vmem [shape: f32[8,128], index: 2, kind: output, shape index: {}]
  %s3 = sld [smem:[#allocation0]]
  $region22: #{lstm_model_forward.1} parent=0
    _
  %s5 = ssub.s32 1, %s3
  %s6 = scalar_select 0, %s5, %s3
  // Predicated region
  $region2: #{lstm_model_forward.1} parent=0 // pred_check
    _
  $region3: #{lstm_model_forward.1} parent=0 // pred_check_branch
    %8 = sbr.rel (0) target = $region5
  $region4: #{lstm_model_forward.1} parent=0 // pred_region
    _
  $region5: #{lstm_model_forward.1} parent=0 // pred_fallthru
    _
  // Predicated region
  $region6: #{lstm_model_forward.1} parent=0 // pred_check
    _
  $region7: #{lstm_model_forward.1} parent=0 // pred_check_branch
    %10 = sbr.rel (0) target = $region9
  $region8: #{lstm_model_forward.1} parent=0 // pred_region
    _
  $region9: #{lstm_model_forward.1} parent=0 // pred_fallthru
    _
  %p11 = scmp.eq.s32.totalorder 0, 0
  // Predicated region
  $region10: #{lstm_model_forward.1} parent=0 // pred_check
    %p12 = pneg %p11
  $region11: #{lstm_model_forward.1} parent=0 // pred_check_branch
    %14 = sbr.rel (%p12) target = $region13
  $region12: #{lstm_model_forward.1} parent=0 // pred_region
    %15 = vst [vmem:[%s2] sm:$0xff] 0.0
    %16 = vst [vmem:[#allocation2] sm:$0xff] 0.0
  $region13: #{lstm_model_forward.1} parent=0 // pred_fallthru
    _
  %v17 = vld [vmem:[%s0] sm:$0xff]
  %v18 = vld [vmem:[%s0 + $0x8] sm:$0xff]
  %v19 = vunpack.c.l.bf16 %v17
  %v20 = vunpack.c.h.bf16 %v17
  %v21 = vunpack.c.l.bf16 %v18
  %v22 = vunpack.c.h.bf16 %v18
  %v23 = vld [vmem:[%s2] sm:$0xff]
  %v24 = vpack.c.bf16 %v23, %v23
  %v25 = vld [vmem:[%s1] sm:$0xff]
  %v26 = vld [vmem:[%s1 + $0x8] sm:$0xff]
  %v27 = vld [vmem:[%s1 + $0x10] sm:$0xff]
  %v28 = vld [vmem:[%s1 + $0x18] sm:$0xff]
  %v29 = vld [vmem:[%s1 + $0x20] sm:$0xff]
  %v30 = vld [vmem:[%s1 + $0x28] sm:$0xff]
  %v31 = vld [vmem:[%s1 + $0x30] sm:$0xff]
  %v32 = vld [vmem:[%s1 + $0x38] sm:$0xff]
  %v33 = vld [vmem:[%s1 + $0x40] sm:$0xff]
  %v34 = vld [vmem:[%s1 + $0x48] sm:$0xff]
  %v35 = vld [vmem:[%s1 + $0x50] sm:$0xff]
  %v36 = vld [vmem:[%s1 + $0x58] sm:$0xff]
  %v37 = vld [vmem:[%s1 + $0x60] sm:$0xff]
  %v38 = vld [vmem:[%s1 + $0x68] sm:$0xff]
  %v39 = vld [vmem:[%s1 + $0x70] sm:$0xff]
  %v40 = vld [vmem:[%s1 + $0x78] sm:$0xff]
  %v41 = vld [vmem:[%s1 + $0x80] sm:$0xff]
  %v42 = vld [vmem:[%s1 + $0x88] sm:$0xff]
  %v43 = vld [vmem:[%s1 + $0x90] sm:$0xff]
  %v44 = vld [vmem:[%s1 + $0x98] sm:$0xff]
  %v45 = vld [vmem:[%s1 + $0xa0] sm:$0xff]
  %v46 = vld [vmem:[%s1 + $0xa8] sm:$0xff]
  %v47 = vld [vmem:[%s1 + $0xb0] sm:$0xff]
  %v48 = vld [vmem:[%s1 + $0xb8] sm:$0xff]
  %v49 = vld [vmem:[%s1 + $0xc0] sm:$0xff]
  %v50 = vld [vmem:[%s1 + $0xc8] sm:$0xff]
  %v51 = vld [vmem:[%s1 + $0xd0] sm:$0xff]
  %v52 = vld [vmem:[%s1 + $0xd8] sm:$0xff]
  %v53 = vld [vmem:[%s1 + $0xe0] sm:$0xff]
  %v54 = vld [vmem:[%s1 + $0xe8] sm:$0xff]
  %v55 = vld [vmem:[%s1 + $0xf0] sm:$0xff]
  %v56 = vld [vmem:[%s1 + $0xf8] sm:$0xff]
  %v89 = vunpack.c.l.b16 %v25
  %v90 = vunpack.c.h.b16 %v25
  %v91 = vunpack.c.l.b16 %v26
  %v92 = vunpack.c.h.b16 %v26
  %v93 = vunpack.c.l.b16 %v27
  %v94 = vunpack.c.h.b16 %v27
  %v95 = vunpack.c.l.b16 %v28
  %v96 = vunpack.c.h.b16 %v28
  %v97 = vunpack.c.l.b16 %v29
  %v98 = vunpack.c.h.b16 %v29
  %v99 = vunpack.c.l.b16 %v30
  %v100 = vunpack.c.h.b16 %v30
  %v101 = vunpack.c.l.b16 %v31
  %v102 = vunpack.c.h.b16 %v31
  %v103 = vunpack.c.l.b16 %v32
  %v104 = vunpack.c.h.b16 %v32
  %v105 = vunpack.c.l.b16 %v33
  %v106 = vunpack.c.h.b16 %v33
  %v107 = vunpack.c.l.b16 %v34
  %v108 = vunpack.c.h.b16 %v34
  %v109 = vunpack.c.l.b16 %v35
  %v110 = vunpack.c.h.b16 %v35
  %v111 = vunpack.c.l.b16 %v36
  %v112 = vunpack.c.h.b16 %v36
  %v113 = vunpack.c.l.b16 %v37
  %v114 = vunpack.c.h.b16 %v37
  %v115 = vunpack.c.l.b16 %v38
  %v116 = vunpack.c.h.b16 %v38
  %v117 = vunpack.c.l.b16 %v39
  %v118 = vunpack.c.h.b16 %v39
  %v119 = vunpack.c.l.b16 %v40
  %v120 = vunpack.c.h.b16 %v40
  %v121 = vunpack.c.l.b16 %v41
  %v122 = vunpack.c.h.b16 %v41
  %v123 = vunpack.c.l.b16 %v42
  %v124 = vunpack.c.h.b16 %v42
  %v125 = vunpack.c.l.b16 %v43
  %v126 = vunpack.c.h.b16 %v43
  %v127 = vunpack.c.l.b16 %v44
  %v128 = vunpack.c.h.b16 %v44
  %v129 = vunpack.c.l.b16 %v45
  %v130 = vunpack.c.h.b16 %v45
  %v131 = vunpack.c.l.b16 %v46
  %v132 = vunpack.c.h.b16 %v46
  %v133 = vunpack.c.l.b16 %v47
  %v134 = vunpack.c.h.b16 %v47
  %v135 = vunpack.c.l.b16 %v48
  %v136 = vunpack.c.h.b16 %v48
  %v137 = vunpack.c.l.b16 %v49
  %v138 = vunpack.c.h.b16 %v49
  %v139 = vunpack.c.l.b16 %v50
  %v140 = vunpack.c.h.b16 %v50
  %v141 = vunpack.c.l.b16 %v51
  %v142 = vunpack.c.h.b16 %v51
  %v143 = vunpack.c.l.b16 %v52
  %v144 = vunpack.c.h.b16 %v52
  %v145 = vunpack.c.l.b16 %v53
  %v146 = vunpack.c.h.b16 %v53
  %v147 = vunpack.c.l.b16 %v54
  %v148 = vunpack.c.h.b16 %v54
  %v149 = vunpack.c.l.b16 %v55
  %v150 = vunpack.c.h.b16 %v55
  %v151 = vunpack.c.l.b16 %v56
  %v152 = vunpack.c.h.b16 %v56
  %v153 = vpack.c.b16 %v93, %v89
  %v154 = vpack.c.b16 %v94, %v90
  %v155 = vpack.c.b16 %v95, %v91
  %v156 = vpack.c.b16 %v96, %v92
  %v157 = vpack.c.b16 %v101, %v97
  %v158 = vpack.c.b16 %v102, %v98
  %v159 = vpack.c.b16 %v103, %v99
  %v160 = vpack.c.b16 %v104, %v100
  %v161 = vpack.c.b16 %v109, %v105
  %v162 = vpack.c.b16 %v110, %v106
  %v163 = vpack.c.b16 %v111, %v107
  %v164 = vpack.c.b16 %v112, %v108
  %v165 = vpack.c.b16 %v117, %v113
  %v166 = vpack.c.b16 %v118, %v114
  %v167 = vpack.c.b16 %v119, %v115
  %v168 = vpack.c.b16 %v120, %v116
  %v169 = vpack.c.b16 %v125, %v121
  %v170 = vpack.c.b16 %v126, %v122
  %v171 = vpack.c.b16 %v127, %v123
  %v172 = vpack.c.b16 %v128, %v124
  %v173 = vpack.c.b16 %v133, %v129
  %v174 = vpack.c.b16 %v134, %v130
  %v175 = vpack.c.b16 %v135, %v131
  %v176 = vpack.c.b16 %v136, %v132
  %v177 = vpack.c.b16 %v141, %v137
  %v178 = vpack.c.b16 %v142, %v138
  %v179 = vpack.c.b16 %v143, %v139
  %v180 = vpack.c.b16 %v144, %v140
  %v181 = vpack.c.b16 %v149, %v145
  %v182 = vpack.c.b16 %v150, %v146
  %v183 = vpack.c.b16 %v151, %v147
  %v184 = vpack.c.b16 %v152, %v148
  %217 = vmatpush.bf16.msra.mxu0 %v181
  %218 = vmatpush.bf16.msra.mxu0 %v177
  %219 = vmatpush.bf16.msra.mxu0 %v173
  %220 = vmatpush.bf16.msra.mxu0 %v169
  %221 = vmatpush.bf16.msra.mxu0 %v165
  %222 = vmatpush.bf16.msra.mxu0 %v161
  %223 = vmatpush.bf16.msra.mxu0 %v157
  %224 = vmatpush.bf16.msra.mxu0 %v153
  %225 = vmatmul.bf16.gmra.mxu0 %v24
  %v226 = vpop.f32.mrf.mxu0
  %v227 = vadd.f32 0.0, %v226
  %v228 = vpop.f32.mrf.mxu0
  %229 = vdwg.mxu0
  %230 = vmatpush.bf16.msra.mxu0 %v182
  %231 = vmatpush.bf16.msra.mxu0 %v178
  %232 = vmatpush.bf16.msra.mxu0 %v174
  %233 = vmatpush.bf16.msra.mxu0 %v170
  %234 = vmatpush.bf16.msra.mxu0 %v166
  %235 = vmatpush.bf16.msra.mxu0 %v162
  %236 = vmatpush.bf16.msra.mxu0 %v158
  %237 = vmatpush.bf16.msra.mxu0 %v154
  %238 = vmatmul.bf16.gmra.mxu0 %v24
  %v239 = vpop.f32.mrf.mxu0
  %v240 = vadd.f32 0.0, %v239
  %v241 = vpop.f32.mrf.mxu0
  %242 = vdwg.mxu0
  %243 = vmatpush.bf16.msra.mxu0 %v183
  %244 = vmatpush.bf16.msra.mxu0 %v179
  %245 = vmatpush.bf16.msra.mxu0 %v175
  %246 = vmatpush.bf16.msra.mxu0 %v171
  %247 = vmatpush.bf16.msra.mxu0 %v167
  %248 = vmatpush.bf16.msra.mxu0 %v163
  %249 = vmatpush.bf16.msra.mxu0 %v159
  %250 = vmatpush.bf16.msra.mxu0 %v155
  %251 = vmatmul.bf16.gmra.mxu0 %v24
  %v252 = vpop.f32.mrf.mxu0
  %v253 = vadd.f32 0.0, %v252
  %v254 = vpop.f32.mrf.mxu0
  %255 = vdwg.mxu0
  %256 = vmatpush.bf16.msra.mxu0 %v184
  %257 = vmatpush.bf16.msra.mxu0 %v180
  %258 = vmatpush.bf16.msra.mxu0 %v176
  %259 = vmatpush.bf16.msra.mxu0 %v172
  %260 = vmatpush.bf16.msra.mxu0 %v168
  %261 = vmatpush.bf16.msra.mxu0 %v164
  %262 = vmatpush.bf16.msra.mxu0 %v160
  %263 = vmatpush.bf16.msra.mxu0 %v156
  %264 = vmatmul.bf16.gmra.mxu0 %v24
  %v265 = vpop.f32.mrf.mxu0
  %v266 = vadd.f32 0.0, %v265
  %v267 = vpop.f32.mrf.mxu0
  %268 = vdwg.mxu0
  %v269 = vadd.f32 %v19, %v227
  %v270 = vadd.f32 %v20, %v240
  %v271 = vadd.f32 %v21, %v253
  %v272 = vadd.f32 %v22, %v266
  %v273 = vtanh.pop %v269
  %v274 = vtanh.pop %v270
  %v275 = vtanh.pop %v271
  %v276 = vtanh.pop %v272
  %v277 = vmul.f32 %v273, 0.5
  %v278 = vmul.f32 %v274, 0.5
  %v279 = vmul.f32 %v275, 0.5
  %v280 = vadd.f32 %v277, 0.5
  %v281 = vadd.f32 %v278, 0.5
  %v282 = vadd.f32 %v279, 0.5
  %v283 = vld [vmem:[#allocation2] sm:$0xff]
  %v284 = vmul.f32 %v281, %v283
  %v285 = vmul.f32 %v280, %v276
  %v286 = vadd.f32 %v284, %v285
  %287 = vst [vmem:[#allocation2] sm:$0xff] %v286
  %v288 = vtanh.pop %v286
  %v289 = vmul.f32 %v282, %v288
  %290 = vst [vmem:[%s2] sm:$0xff] %v289
  %s291 = scalar_lea.vmem %s0, 16
  %v292 = vld [vmem:[%s291] sm:$0xff]
  %v293 = vld [vmem:[%s291 + $0x8] sm:$0xff]
  %v294 = vunpack.c.l.bf16 %v292
  %v295 = vunpack.c.h.bf16 %v292
  %v296 = vunpack.c.l.bf16 %v293
  %v297 = vunpack.c.h.bf16 %v293
  %v298 = vld [vmem:[%s2] sm:$0xff]
  %v299 = vpack.c.bf16 %v298, %v298
  %v300 = vld [vmem:[%s1] sm:$0xff]
  %v301 = vld [vmem:[%s1 + $0x8] sm:$0xff]
  %v302 = vld [vmem:[%s1 + $0x10] sm:$0xff]
  %v303 = vld [vmem:[%s1 + $0x18] sm:$0xff]
  %v304 = vld [vmem:[%s1 + $0x20] sm:$0xff]
  %v305 = vld [vmem:[%s1 + $0x28] sm:$0xff]
  %v306 = vld [vmem:[%s1 + $0x30] sm:$0xff]
  %v307 = vld [vmem:[%s1 + $0x38] sm:$0xff]
  %v308 = vld [vmem:[%s1 + $0x40] sm:$0xff]
  %v309 = vld [vmem:[%s1 + $0x48] sm:$0xff]
  %v310 = vld [vmem:[%s1 + $0x50] sm:$0xff]
  %v311 = vld [vmem:[%s1 + $0x58] sm:$0xff]
  %v312 = vld [vmem:[%s1 + $0x60] sm:$0xff]
  %v313 = vld [vmem:[%s1 + $0x68] sm:$0xff]
  %v314 = vld [vmem:[%s1 + $0x70] sm:$0xff]
  %v315 = vld [vmem:[%s1 + $0x78] sm:$0xff]
  %v316 = vld [vmem:[%s1 + $0x80] sm:$0xff]
  %v317 = vld [vmem:[%s1 + $0x88] sm:$0xff]
  %v318 = vld [vmem:[%s1 + $0x90] sm:$0xff]
  %v319 = vld [vmem:[%s1 + $0x98] sm:$0xff]
  %v320 = vld [vmem:[%s1 + $0xa0] sm:$0xff]
  %v321 = vld [vmem:[%s1 + $0xa8] sm:$0xff]
  %v322 = vld [vmem:[%s1 + $0xb0] sm:$0xff]
  %v323 = vld [vmem:[%s1 + $0xb8] sm:$0xff]
  %v324 = vld [vmem:[%s1 + $0xc0] sm:$0xff]
  %v325 = vld [vmem:[%s1 + $0xc8] sm:$0xff]
  %v326 = vld [vmem:[%s1 + $0xd0] sm:$0xff]
  %v327 = vld [vmem:[%s1 + $0xd8] sm:$0xff]
  %v328 = vld [vmem:[%s1 + $0xe0] sm:$0xff]
  %v329 = vld [vmem:[%s1 + $0xe8] sm:$0xff]
  %v330 = vld [vmem:[%s1 + $0xf0] sm:$0xff]
  %v331 = vld [vmem:[%s1 + $0xf8] sm:$0xff]
  %v364 = vunpack.c.l.b16 %v300
  %v365 = vunpack.c.h.b16 %v300
  %v366 = vunpack.c.l.b16 %v301
  %v367 = vunpack.c.h.b16 %v301
  %v368 = vunpack.c.l.b16 %v302
  %v369 = vunpack.c.h.b16 %v302
  %v370 = vunpack.c.l.b16 %v303
  %v371 = vunpack.c.h.b16 %v303
  %v372 = vunpack.c.l.b16 %v304
  %v373 = vunpack.c.h.b16 %v304
  %v374 = vunpack.c.l.b16 %v305
  %v375 = vunpack.c.h.b16 %v305
  %v376 = vunpack.c.l.b16 %v306
  %v377 = vunpack.c.h.b16 %v306
  %v378 = vunpack.c.l.b16 %v307
  %v379 = vunpack.c.h.b16 %v307
  %v380 = vunpack.c.l.b16 %v308
  %v381 = vunpack.c.h.b16 %v308
  %v382 = vunpack.c.l.b16 %v309
  %v383 = vunpack.c.h.b16 %v309
  %v384 = vunpack.c.l.b16 %v310
  %v385 = vunpack.c.h.b16 %v310
  %v386 = vunpack.c.l.b16 %v311
  %v387 = vunpack.c.h.b16 %v311
  %v388 = vunpack.c.l.b16 %v312
  %v389 = vunpack.c.h.b16 %v312
  %v390 = vunpack.c.l.b16 %v313
  %v391 = vunpack.c.h.b16 %v313
  %v392 = vunpack.c.l.b16 %v314
  %v393 = vunpack.c.h.b16 %v314
  %v394 = vunpack.c.l.b16 %v315
  %v395 = vunpack.c.h.b16 %v315
  %v396 = vunpack.c.l.b16 %v316
  %v397 = vunpack.c.h.b16 %v316
  %v398 = vunpack.c.l.b16 %v317
  %v399 = vunpack.c.h.b16 %v317
  %v400 = vunpack.c.l.b16 %v318
  %v401 = vunpack.c.h.b16 %v318
  %v402 = vunpack.c.l.b16 %v319
  %v403 = vunpack.c.h.b16 %v319
  %v404 = vunpack.c.l.b16 %v320
  %v405 = vunpack.c.h.b16 %v320
  %v406 = vunpack.c.l.b16 %v321
  %v407 = vunpack.c.h.b16 %v321
  %v408 = vunpack.c.l.b16 %v322
  %v409 = vunpack.c.h.b16 %v322
  %v410 = vunpack.c.l.b16 %v323
  %v411 = vunpack.c.h.b16 %v323
  %v412 = vunpack.c.l.b16 %v324
  %v413 = vunpack.c.h.b16 %v324
  %v414 = vunpack.c.l.b16 %v325
  %v415 = vunpack.c.h.b16 %v325
  %v416 = vunpack.c.l.b16 %v326
  %v417 = vunpack.c.h.b16 %v326
  %v418 = vunpack.c.l.b16 %v327
  %v419 = vunpack.c.h.b16 %v327
  %v420 = vunpack.c.l.b16 %v328
  %v421 = vunpack.c.h.b16 %v328
  %v422 = vunpack.c.l.b16 %v329
  %v423 = vunpack.c.h.b16 %v329
  %v424 = vunpack.c.l.b16 %v330
  %v425 = vunpack.c.h.b16 %v330
  %v426 = vunpack.c.l.b16 %v331
  %v427 = vunpack.c.h.b16 %v331
  %v428 = vpack.c.b16 %v368, %v364
  %v429 = vpack.c.b16 %v369, %v365
  %v430 = vpack.c.b16 %v370, %v366
  %v431 = vpack.c.b16 %v371, %v367
  %v432 = vpack.c.b16 %v376, %v372
  %v433 = vpack.c.b16 %v377, %v373
  %v434 = vpack.c.b16 %v378, %v374
  %v435 = vpack.c.b16 %v379, %v375
  %v436 = vpack.c.b16 %v384, %v380
  %v437 = vpack.c.b16 %v385, %v381
  %v438 = vpack.c.b16 %v386, %v382
  %v439 = vpack.c.b16 %v387, %v383
  %v440 = vpack.c.b16 %v392, %v388
  %v441 = vpack.c.b16 %v393, %v389
  %v442 = vpack.c.b16 %v394, %v390
  %v443 = vpack.c.b16 %v395, %v391
  %v444 = vpack.c.b16 %v400, %v396
  %v445 = vpack.c.b16 %v401, %v397
  %v446 = vpack.c.b16 %v402, %v398
  %v447 = vpack.c.b16 %v403, %v399
  %v448 = vpack.c.b16 %v408, %v404
  %v449 = vpack.c.b16 %v409, %v405
  %v450 = vpack.c.b16 %v410, %v406
  %v451 = vpack.c.b16 %v411, %v407
  %v452 = vpack.c.b16 %v416, %v412
  %v453 = vpack.c.b16 %v417, %v413
  %v454 = vpack.c.b16 %v418, %v414
  %v455 = vpack.c.b16 %v419, %v415
  %v456 = vpack.c.b16 %v424, %v420
  %v457 = vpack.c.b16 %v425, %v421
  %v458 = vpack.c.b16 %v426, %v422
  %v459 = vpack.c.b16 %v427, %v423
  %492 = vmatpush.bf16.msra.mxu0 %v456
  %493 = vmatpush.bf16.msra.mxu0 %v452
  %494 = vmatpush.bf16.msra.mxu0 %v448
  %495 = vmatpush.bf16.msra.mxu0 %v444
  %496 = vmatpush.bf16.msra.mxu0 %v440
  %497 = vmatpush.bf16.msra.mxu0 %v436
  %498 = vmatpush.bf16.msra.mxu0 %v432
  %499 = vmatpush.bf16.msra.mxu0 %v428
  %500 = vmatmul.bf16.gmra.mxu0 %v299
  %v501 = vpop.f32.mrf.mxu0
  %v502 = vadd.f32 0.0, %v501
  %v503 = vpop.f32.mrf.mxu0
  %504 = vdwg.mxu0
  %505 = vmatpush.bf16.msra.mxu0 %v457
  %506 = vmatpush.bf16.msra.mxu0 %v453
  %507 = vmatpush.bf16.msra.mxu0 %v449
  %508 = vmatpush.bf16.msra.mxu0 %v445
  %509 = vmatpush.bf16.msra.mxu0 %v441
  %510 = vmatpush.bf16.msra.mxu0 %v437
  %511 = vmatpush.bf16.msra.mxu0 %v433
  %512 = vmatpush.bf16.msra.mxu0 %v429
  %513 = vmatmul.bf16.gmra.mxu0 %v299
  %v514 = vpop.f32.mrf.mxu0
  %v515 = vadd.f32 0.0, %v514
  %v516 = vpop.f32.mrf.mxu0
  %517 = vdwg.mxu0
  %518 = vmatpush.bf16.msra.mxu0 %v458
  %519 = vmatpush.bf16.msra.mxu0 %v454
  %520 = vmatpush.bf16.msra.mxu0 %v450
  %521 = vmatpush.bf16.msra.mxu0 %v446
  %522 = vmatpush.bf16.msra.mxu0 %v442
  %523 = vmatpush.bf16.msra.mxu0 %v438
  %524 = vmatpush.bf16.msra.mxu0 %v434
  %525 = vmatpush.bf16.msra.mxu0 %v430
  %526 = vmatmul.bf16.gmra.mxu0 %v299
  %v527 = vpop.f32.mrf.mxu0
  %v528 = vadd.f32 0.0, %v527
  %v529 = vpop.f32.mrf.mxu0
  %530 = vdwg.mxu0
  %531 = vmatpush.bf16.msra.mxu0 %v459
  %532 = vmatpush.bf16.msra.mxu0 %v455
  %533 = vmatpush.bf16.msra.mxu0 %v451
  %534 = vmatpush.bf16.msra.mxu0 %v447
  %535 = vmatpush.bf16.msra.mxu0 %v443
  %536 = vmatpush.bf16.msra.mxu0 %v439
  %537 = vmatpush.bf16.msra.mxu0 %v435
  %538 = vmatpush.bf16.msra.mxu0 %v431
  %539 = vmatmul.bf16.gmra.mxu0 %v299
  %v540 = vpop.f32.mrf.mxu0
  %v541 = vadd.f32 0.0, %v540
  %v542 = vpop.f32.mrf.mxu0
  %543 = vdwg.mxu0
  %v544 = vadd.f32 %v294, %v502
  %v545 = vadd.f32 %v295, %v515
  %v546 = vadd.f32 %v296, %v528
  %v547 = vadd.f32 %v297, %v541
  %v548 = vtanh.pop %v544
  %v549 = vtanh.pop %v545
  %v550 = vtanh.pop %v546
  %v551 = vtanh.pop %v547
  %v552 = vmul.f32 %v548, 0.5
  %v553 = vmul.f32 %v549, 0.5
  %v554 = vmul.f32 %v550, 0.5
  %v555 = vadd.f32 %v552, 0.5
  %v556 = vadd.f32 %v553, 0.5
  %v557 = vadd.f32 %v554, 0.5
  %v558 = vld [vmem:[#allocation2] sm:$0xff]
  %v559 = vmul.f32 %v556, %v558
  %v560 = vmul.f32 %v555, %v551
  %v561 = vadd.f32 %v559, %v560
  %562 = vst [vmem:[#allocation2] sm:$0xff] %v561
  %v563 = vtanh.pop %v561
  %v564 = vmul.f32 %v557, %v563
  %565 = vst [vmem:[%s2] sm:$0xff] %v564
  %s566 = scalar_lea.vmem %s0, 32
  %v567 = vld [vmem:[%s566] sm:$0xff]
  %v568 = vld [vmem:[%s566 + $0x8] sm:$0xff]
  %v569 = vunpack.c.l.bf16 %v567
  %v570 = vunpack.c.h.bf16 %v567
  %v571 = vunpack.c.l.bf16 %v568
  %v572 = vunpack.c.h.bf16 %v568
  %v573 = vld [vmem:[%s2] sm:$0xff]
  %v574 = vpack.c.bf16 %v573, %v573
  %v575 = vld [vmem:[%s1] sm:$0xff]
  %v576 = vld [vmem:[%s1 + $0x8] sm:$0xff]
  %v577 = vld [vmem:[%s1 + $0x10] sm:$0xff]
  %v578 = vld [vmem:[%s1 + $0x18] sm:$0xff]
  %v579 = vld [vmem:[%s1 + $0x20] sm:$0xff]
  %v580 = vld [vmem:[%s1 + $0x28] sm:$0xff]
  %v581 = vld [vmem:[%s1 + $0x30] sm:$0xff]
  %v582 = vld [vmem:[%s1 + $0x38] sm:$0xff]
  %v583 = vld [vmem:[%s1 + $0x40] sm:$0xff]
  %v584 = vld [vmem:[%s1 + $0x48] sm:$0xff]
  %v585 = vld [vmem:[%s1 + $0x50] sm:$0xff]
  %v586 = vld [vmem:[%s1 + $0x58] sm:$0xff]
  %v587 = vld [vmem:[%s1 + $0x60] sm:$0xff]
  %v588 = vld [vmem:[%s1 + $0x68] sm:$0xff]
  %v589 = vld [vmem:[%s1 + $0x70] sm:$0xff]
  %v590 = vld [vmem:[%s1 + $0x78] sm:$0xff]
  %v591 = vld [vmem:[%s1 + $0x80] sm:$0xff]
  %v592 = vld [vmem:[%s1 + $0x88] sm:$0xff]
  %v593 = vld [vmem:[%s1 + $0x90] sm:$0xff]
  %v594 = vld [vmem:[%s1 + $0x98] sm:$0xff]
  %v595 = vld [vmem:[%s1 + $0xa0] sm:$0xff]
  %v596 = vld [vmem:[%s1 + $0xa8] sm:$0xff]
  %v597 = vld [vmem:[%s1 + $0xb0] sm:$0xff]
  %v598 = vld [vmem:[%s1 + $0xb8] sm:$0xff]
  %v599 = vld [vmem:[%s1 + $0xc0] sm:$0xff]
  %v600 = vld [vmem:[%s1 + $0xc8] sm:$0xff]
  %v601 = vld [vmem:[%s1 + $0xd0] sm:$0xff]
  %v602 = vld [vmem:[%s1 + $0xd8] sm:$0xff]
  %v603 = vld [vmem:[%s1 + $0xe0] sm:$0xff]
  %v604 = vld [vmem:[%s1 + $0xe8] sm:$0xff]
  %v605 = vld [vmem:[%s1 + $0xf0] sm:$0xff]
  %v606 = vld [vmem:[%s1 + $0xf8] sm:$0xff]
  %v639 = vunpack.c.l.b16 %v575
  %v640 = vunpack.c.h.b16 %v575
  %v641 = vunpack.c.l.b16 %v576
  %v642 = vunpack.c.h.b16 %v576
  %v643 = vunpack.c.l.b16 %v577
  %v644 = vunpack.c.h.b16 %v577
  %v645 = vunpack.c.l.b16 %v578
  %v646 = vunpack.c.h.b16 %v578
  %v647 = vunpack.c.l.b16 %v579
  %v648 = vunpack.c.h.b16 %v579
  %v649 = vunpack.c.l.b16 %v580
  %v650 = vunpack.c.h.b16 %v580
  %v651 = vunpack.c.l.b16 %v581
  %v652 = vunpack.c.h.b16 %v581
  %v653 = vunpack.c.l.b16 %v582
  %v654 = vunpack.c.h.b16 %v582
  %v655 = vunpack.c.l.b16 %v583
  %v656 = vunpack.c.h.b16 %v583
  %v657 = vunpack.c.l.b16 %v584
  %v658 = vunpack.c.h.b16 %v584
  %v659 = vunpack.c.l.b16 %v585
  %v660 = vunpack.c.h.b16 %v585
  %v661 = vunpack.c.l.b16 %v586
  %v662 = vunpack.c.h.b16 %v586
  %v663 = vunpack.c.l.b16 %v587
  %v664 = vunpack.c.h.b16 %v587
  %v665 = vunpack.c.l.b16 %v588
  %v666 = vunpack.c.h.b16 %v588
  %v667 = vunpack.c.l.b16 %v589
  %v668 = vunpack.c.h.b16 %v589
  %v669 = vunpack.c.l.b16 %v590
  %v670 = vunpack.c.h.b16 %v590
  %v671 = vunpack.c.l.b16 %v591
  %v672 = vunpack.c.h.b16 %v591
  %v673 = vunpack.c.l.b16 %v592
  %v674 = vunpack.c.h.b16 %v592
  %v675 = vunpack.c.l.b16 %v593
  %v676 = vunpack.c.h.b16 %v593
  %v677 = vunpack.c.l.b16 %v594
  %v678 = vunpack.c.h.b16 %v594
  %v679 = vunpack.c.l.b16 %v595
  %v680 = vunpack.c.h.b16 %v595
  %v681 = vunpack.c.l.b16 %v596
  %v682 = vunpack.c.h.b16 %v596
  %v683 = vunpack.c.l.b16 %v597
  %v684 = vunpack.c.h.b16 %v597
  %v685 = vunpack.c.l.b16 %v598
  %v686 = vunpack.c.h.b16 %v598
  %v687 = vunpack.c.l.b16 %v599
  %v688 = vunpack.c.h.b16 %v599
  %v689 = vunpack.c.l.b16 %v600
  %v690 = vunpack.c.h.b16 %v600
  %v691 = vunpack.c.l.b16 %v601
  %v692 = vunpack.c.h.b16 %v601
  %v693 = vunpack.c.l.b16 %v602
  %v694 = vunpack.c.h.b16 %v602
  %v695 = vunpack.c.l.b16 %v603
  %v696 = vunpack.c.h.b16 %v603
  %v697 = vunpack.c.l.b16 %v604
  %v698 = vunpack.c.h.b16 %v604
  %v699 = vunpack.c.l.b16 %v605
  %v700 = vunpack.c.h.b16 %v605
  %v701 = vunpack.c.l.b16 %v606
  %v702 = vunpack.c.h.b16 %v606
  %v703 = vpack.c.b16 %v643, %v639
  %v704 = vpack.c.b16 %v644, %v640
  %v705 = vpack.c.b16 %v645, %v641
  %v706 = vpack.c.b16 %v646, %v642
  %v707 = vpack.c.b16 %v651, %v647
  %v708 = vpack.c.b16 %v652, %v648
  %v709 = vpack.c.b16 %v653, %v649
  %v710 = vpack.c.b16 %v654, %v650
  %v711 = vpack.c.b16 %v659, %v655
  %v712 = vpack.c.b16 %v660, %v656
  %v713 = vpack.c.b16 %v661, %v657
  %v714 = vpack.c.b16 %v662, %v658
  %v715 = vpack.c.b16 %v667, %v663
  %v716 = vpack.c.b16 %v668, %v664
  %v717 = vpack.c.b16 %v669, %v665
  %v718 = vpack.c.b16 %v670, %v666
  %v719 = vpack.c.b16 %v675, %v671
  %v720 = vpack.c.b16 %v676, %v672
  %v721 = vpack.c.b16 %v677, %v673
  %v722 = vpack.c.b16 %v678, %v674
  %v723 = vpack.c.b16 %v683, %v679
  %v724 = vpack.c.b16 %v684, %v680
  %v725 = vpack.c.b16 %v685, %v681
  %v726 = vpack.c.b16 %v686, %v682
  %v727 = vpack.c.b16 %v691, %v687
  %v728 = vpack.c.b16 %v692, %v688
  %v729 = vpack.c.b16 %v693, %v689
  %v730 = vpack.c.b16 %v694, %v690
  %v731 = vpack.c.b16 %v699, %v695
  %v732 = vpack.c.b16 %v700, %v696
  %v733 = vpack.c.b16 %v701, %v697
  %v734 = vpack.c.b16 %v702, %v698
  %767 = vmatpush.bf16.msra.mxu0 %v731
  %768 = vmatpush.bf16.msra.mxu0 %v727
  %769 = vmatpush.bf16.msra.mxu0 %v723
  %770 = vmatpush.bf16.msra.mxu0 %v719
  %771 = vmatpush.bf16.msra.mxu0 %v715
  %772 = vmatpush.bf16.msra.mxu0 %v711
  %773 = vmatpush.bf16.msra.mxu0 %v707
  %774 = vmatpush.bf16.msra.mxu0 %v703
  %775 = vmatmul.bf16.gmra.mxu0 %v574
  %v776 = vpop.f32.mrf.mxu0
  %v777 = vadd.f32 0.0, %v776
  %v778 = vpop.f32.mrf.mxu0
  %779 = vdwg.mxu0
  %780 = vmatpush.bf16.msra.mxu0 %v732
  %781 = vmatpush.bf16.msra.mxu0 %v728
  %782 = vmatpush.bf16.msra.mxu0 %v724
  %783 = vmatpush.bf16.msra.mxu0 %v720
  %784 = vmatpush.bf16.msra.mxu0 %v716
  %785 = vmatpush.bf16.msra.mxu0 %v712
  %786 = vmatpush.bf16.msra.mxu0 %v708
  %787 = vmatpush.bf16.msra.mxu0 %v704
  %788 = vmatmul.bf16.gmra.mxu0 %v574
  %v789 = vpop.f32.mrf.mxu0
  %v790 = vadd.f32 0.0, %v789
  %v791 = vpop.f32.mrf.mxu0
  %792 = vdwg.mxu0
  %793 = vmatpush.bf16.msra.mxu0 %v733
  %794 = vmatpush.bf16.msra.mxu0 %v729
  %795 = vmatpush.bf16.msra.mxu0 %v725
  %796 = vmatpush.bf16.msra.mxu0 %v721
  %797 = vmatpush.bf16.msra.mxu0 %v717
  %798 = vmatpush.bf16.msra.mxu0 %v713
  %799 = vmatpush.bf16.msra.mxu0 %v709
  %800 = vmatpush.bf16.msra.mxu0 %v705
  %801 = vmatmul.bf16.gmra.mxu0 %v574
  %v802 = vpop.f32.mrf.mxu0
  %v803 = vadd.f32 0.0, %v802
  %v804 = vpop.f32.mrf.mxu0
  %805 = vdwg.mxu0
  %806 = vmatpush.bf16.msra.mxu0 %v734
  %807 = vmatpush.bf16.msra.mxu0 %v730
  %808 = vmatpush.bf16.msra.mxu0 %v726
  %809 = vmatpush.bf16.msra.mxu0 %v722
  %810 = vmatpush.bf16.msra.mxu0 %v718
  %811 = vmatpush.bf16.msra.mxu0 %v714
  %812 = vmatpush.bf16.msra.mxu0 %v710
  %813 = vmatpush.bf16.msra.mxu0 %v706
  %814 = vmatmul.bf16.gmra.mxu0 %v574
  %v815 = vpop.f32.mrf.mxu0
  %v816 = vadd.f32 0.0, %v815
  %v817 = vpop.f32.mrf.mxu0
  %818 = vdwg.mxu0
  %v819 = vadd.f32 %v569, %v777
  %v820 = vadd.f32 %v570, %v790
  %v821 = vadd.f32 %v571, %v803
  %v822 = vadd.f32 %v572, %v816
  %v823 = vtanh.pop %v819
  %v824 = vtanh.pop %v820
  %v825 = vtanh.pop %v821
  %v826 = vtanh.pop %v822
  %v827 = vmul.f32 %v823, 0.5
  %v828 = vmul.f32 %v824, 0.5
  %v829 = vmul.f32 %v825, 0.5
  %v830 = vadd.f32 %v827, 0.5
  %v831 = vadd.f32 %v828, 0.5
  %v832 = vadd.f32 %v829, 0.5
  %v833 = vld [vmem:[#allocation2] sm:$0xff]
  %v834 = vmul.f32 %v831, %v833
  %v835 = vmul.f32 %v830, %v826
  %v836 = vadd.f32 %v834, %v835
  %837 = vst [vmem:[#allocation2] sm:$0xff] %v836
  %v838 = vtanh.pop %v836
  %v839 = vmul.f32 %v832, %v838
  %840 = vst [vmem:[%s2] sm:$0xff] %v839
  %s841 = scalar_lea.vmem %s0, 48
  %v842 = vld [vmem:[%s841] sm:$0xff]
  %v843 = vld [vmem:[%s841 + $0x8] sm:$0xff]
  %v844 = vunpack.c.l.bf16 %v842
  %v845 = vunpack.c.h.bf16 %v842
  %v846 = vunpack.c.l.bf16 %v843
  %v847 = vunpack.c.h.bf16 %v843
  %v848 = vld [vmem:[%s2] sm:$0xff]
  %v849 = vpack.c.bf16 %v848, %v848
  %v850 = vld [vmem:[%s1] sm:$0xff]
  %v851 = vld [vmem:[%s1 + $0x8] sm:$0xff]
  %v852 = vld [vmem:[%s1 + $0x10] sm:$0xff]
  %v853 = vld [vmem:[%s1 + $0x18] sm:$0xff]
  %v854 = vld [vmem:[%s1 + $0x20] sm:$0xff]
  %v855 = vld [vmem:[%s1 + $0x28] sm:$0xff]
  %v856 = vld [vmem:[%s1 + $0x30] sm:$0xff]
  %v857 = vld [vmem:[%s1 + $0x38] sm:$0xff]
  %v858 = vld [vmem:[%s1 + $0x40] sm:$0xff]
  %v859 = vld [vmem:[%s1 + $0x48] sm:$0xff]
  %v860 = vld [vmem:[%s1 + $0x50] sm:$0xff]
  %v861 = vld [vmem:[%s1 + $0x58] sm:$0xff]
  %v862 = vld [vmem:[%s1 + $0x60] sm:$0xff]
  %v863 = vld [vmem:[%s1 + $0x68] sm:$0xff]
  %v864 = vld [vmem:[%s1 + $0x70] sm:$0xff]
  %v865 = vld [vmem:[%s1 + $0x78] sm:$0xff]
  %v866 = vld [vmem:[%s1 + $0x80] sm:$0xff]
  %v867 = vld [vmem:[%s1 + $0x88] sm:$0xff]
  %v868 = vld [vmem:[%s1 + $0x90] sm:$0xff]
  %v869 = vld [vmem:[%s1 + $0x98] sm:$0xff]
  %v870 = vld [vmem:[%s1 + $0xa0] sm:$0xff]
  %v871 = vld [vmem:[%s1 + $0xa8] sm:$0xff]
  %v872 = vld [vmem:[%s1 + $0xb0] sm:$0xff]
  %v873 = vld [vmem:[%s1 + $0xb8] sm:$0xff]
  %v874 = vld [vmem:[%s1 + $0xc0] sm:$0xff]
  %v875 = vld [vmem:[%s1 + $0xc8] sm:$0xff]
  %v876 = vld [vmem:[%s1 + $0xd0] sm:$0xff]
  %v877 = vld [vmem:[%s1 + $0xd8] sm:$0xff]
  %v878 = vld [vmem:[%s1 + $0xe0] sm:$0xff]
  %v879 = vld [vmem:[%s1 + $0xe8] sm:$0xff]
  %v880 = vld [vmem:[%s1 + $0xf0] sm:$0xff]
  %v881 = vld [vmem:[%s1 + $0xf8] sm:$0xff]
  %v914 = vunpack.c.l.b16 %v850
  %v915 = vunpack.c.h.b16 %v850
  %v916 = vunpack.c.l.b16 %v851
  %v917 = vunpack.c.h.b16 %v851
  %v918 = vunpack.c.l.b16 %v852
  %v919 = vunpack.c.h.b16 %v852
  %v920 = vunpack.c.l.b16 %v853
  %v921 = vunpack.c.h.b16 %v853
  %v922 = vunpack.c.l.b16 %v854
  %v923 = vunpack.c.h.b16 %v854
  %v924 = vunpack.c.l.b16 %v855
  %v925 = vunpack.c.h.b16 %v855
  %v926 = vunpack.c.l.b16 %v856
  %v927 = vunpack.c.h.b16 %v856
  %v928 = vunpack.c.l.b16 %v857
  %v929 = vunpack.c.h.b16 %v857
  %v930 = vunpack.c.l.b16 %v858
  %v931 = vunpack.c.h.b16 %v858
  %v932 = vunpack.c.l.b16 %v859
  %v933 = vunpack.c.h.b16 %v859
  %v934 = vunpack.c.l.b16 %v860
  %v935 = vunpack.c.h.b16 %v860
  %v936 = vunpack.c.l.b16 %v861
  %v937 = vunpack.c.h.b16 %v861
  %v938 = vunpack.c.l.b16 %v862
  %v939 = vunpack.c.h.b16 %v862
  %v940 = vunpack.c.l.b16 %v863
  %v941 = vunpack.c.h.b16 %v863
  %v942 = vunpack.c.l.b16 %v864
  %v943 = vunpack.c.h.b16 %v864
  %v944 = vunpack.c.l.b16 %v865
  %v945 = vunpack.c.h.b16 %v865
  %v946 = vunpack.c.l.b16 %v866
  %v947 = vunpack.c.h.b16 %v866
  %v948 = vunpack.c.l.b16 %v867
  %v949 = vunpack.c.h.b16 %v867
  %v950 = vunpack.c.l.b16 %v868
  %v951 = vunpack.c.h.b16 %v868
  %v952 = vunpack.c.l.b16 %v869
  %v953 = vunpack.c.h.b16 %v869
  %v954 = vunpack.c.l.b16 %v870
  %v955 = vunpack.c.h.b16 %v870
  %v956 = vunpack.c.l.b16 %v871
  %v957 = vunpack.c.h.b16 %v871
  %v958 = vunpack.c.l.b16 %v872
  %v959 = vunpack.c.h.b16 %v872
  %v960 = vunpack.c.l.b16 %v873
  %v961 = vunpack.c.h.b16 %v873
  %v962 = vunpack.c.l.b16 %v874
  %v963 = vunpack.c.h.b16 %v874
  %v964 = vunpack.c.l.b16 %v875
  %v965 = vunpack.c.h.b16 %v875
  %v966 = vunpack.c.l.b16 %v876
  %v967 = vunpack.c.h.b16 %v876
  %v968 = vunpack.c.l.b16 %v877
  %v969 = vunpack.c.h.b16 %v877
  %v970 = vunpack.c.l.b16 %v878
  %v971 = vunpack.c.h.b16 %v878
  %v972 = vunpack.c.l.b16 %v879
  %v973 = vunpack.c.h.b16 %v879
  %v974 = vunpack.c.l.b16 %v880
  %v975 = vunpack.c.h.b16 %v880
  %v976 = vunpack.c.l.b16 %v881
  %v977 = vunpack.c.h.b16 %v881
  %v978 = vpack.c.b16 %v918, %v914
  %v979 = vpack.c.b16 %v919, %v915
  %v980 = vpack.c.b16 %v920, %v916
  %v981 = vpack.c.b16 %v921, %v917
  %v982 = vpack.c.b16 %v926, %v922
  %v983 = vpack.c.b16 %v927, %v923
  %v984 = vpack.c.b16 %v928, %v924
  %v985 = vpack.c.b16 %v929, %v925
  %v986 = vpack.c.b16 %v934, %v930
  %v987 = vpack.c.b16 %v935, %v931
  %v988 = vpack.c.b16 %v936, %v932
  %v989 = vpack.c.b16 %v937, %v933
  %v990 = vpack.c.b16 %v942, %v938
  %v991 = vpack.c.b16 %v943, %v939
  %v992 = vpack.c.b16 %v944, %v940
  %v993 = vpack.c.b16 %v945, %v941
  %v994 = vpack.c.b16 %v950, %v946
  %v995 = vpack.c.b16 %v951, %v947
  %v996 = vpack.c.b16 %v952, %v948
  %v997 = vpack.c.b16 %v953, %v949
  %v998 = vpack.c.b16 %v958, %v954
  %v999 = vpack.c.b16 %v959, %v955
  %v1000 = vpack.c.b16 %v960, %v956
  %v1001 = vpack.c.b16 %v961, %v957
  %v1002 = vpack.c.b16 %v966, %v962
  %v1003 = vpack.c.b16 %v967, %v963
  %v1004 = vpack.c.b16 %v968, %v964
  %v1005 = vpack.c.b16 %v969, %v965
  %v1006 = vpack.c.b16 %v974, %v970
  %v1007 = vpack.c.b16 %v975, %v971
  %v1008 = vpack.c.b16 %v976, %v972
  %v1009 = vpack.c.b16 %v977, %v973
  %1042 = vmatpush.bf16.msra.mxu0 %v1006
  %1043 = vmatpush.bf16.msra.mxu0 %v1002
  %1044 = vmatpush.bf16.msra.mxu0 %v998
  %1045 = vmatpush.bf16.msra.mxu0 %v994
  %1046 = vmatpush.bf16.msra.mxu0 %v990
  %1047 = vmatpush.bf16.msra.mxu0 %v986
  %1048 = vmatpush.bf16.msra.mxu0 %v982
  %1049 = vmatpush.bf16.msra.mxu0 %v978
  %1050 = vmatmul.bf16.gmra.mxu0 %v849
  %v1051 = vpop.f32.mrf.mxu0
  %v1052 = vadd.f32 0.0, %v1051
  %v1053 = vpop.f32.mrf.mxu0
  %1054 = vdwg.mxu0
  %1055 = vmatpush.bf16.msra.mxu0 %v1007
  %1056 = vmatpush.bf16.msra.mxu0 %v1003
  %1057 = vmatpush.bf16.msra.mxu0 %v999
  %1058 = vmatpush.bf16.msra.mxu0 %v995
  %1059 = vmatpush.bf16.msra.mxu0 %v991
  %1060 = vmatpush.bf16.msra.mxu0 %v987
  %1061 = vmatpush.bf16.msra.mxu0 %v983
  %1062 = vmatpush.bf16.msra.mxu0 %v979
  %1063 = vmatmul.bf16.gmra.mxu0 %v849
  %v1064 = vpop.f32.mrf.mxu0
  %v1065 = vadd.f32 0.0, %v1064
  %v1066 = vpop.f32.mrf.mxu0
  %1067 = vdwg.mxu0
  %1068 = vmatpush.bf16.msra.mxu0 %v1008
  %1069 = vmatpush.bf16.msra.mxu0 %v1004
  %1070 = vmatpush.bf16.msra.mxu0 %v1000
  %1071 = vmatpush.bf16.msra.mxu0 %v996
  %1072 = vmatpush.bf16.msra.mxu0 %v992
  %1073 = vmatpush.bf16.msra.mxu0 %v988
  %1074 = vmatpush.bf16.msra.mxu0 %v984
  %1075 = vmatpush.bf16.msra.mxu0 %v980
  %1076 = vmatmul.bf16.gmra.mxu0 %v849
  %v1077 = vpop.f32.mrf.mxu0
  %v1078 = vadd.f32 0.0, %v1077
  %v1079 = vpop.f32.mrf.mxu0
  %1080 = vdwg.mxu0
  %1081 = vmatpush.bf16.msra.mxu0 %v1009
  %1082 = vmatpush.bf16.msra.mxu0 %v1005
  %1083 = vmatpush.bf16.msra.mxu0 %v1001
  %1084 = vmatpush.bf16.msra.mxu0 %v997
  %1085 = vmatpush.bf16.msra.mxu0 %v993
  %1086 = vmatpush.bf16.msra.mxu0 %v989
  %1087 = vmatpush.bf16.msra.mxu0 %v985
  %1088 = vmatpush.bf16.msra.mxu0 %v981
  %1089 = vmatmul.bf16.gmra.mxu0 %v849
  %v1090 = vpop.f32.mrf.mxu0
  %v1091 = vadd.f32 0.0, %v1090
  %v1092 = vpop.f32.mrf.mxu0
  %1093 = vdwg.mxu0
  %v1094 = vadd.f32 %v844, %v1052
  %v1095 = vadd.f32 %v845, %v1065
  %v1096 = vadd.f32 %v846, %v1078
  %v1097 = vadd.f32 %v847, %v1091
  %v1098 = vtanh.pop %v1094
  %v1099 = vtanh.pop %v1095
  %v1100 = vtanh.pop %v1096
  %v1101 = vtanh.pop %v1097
  %v1102 = vmul.f32 %v1098, 0.5
  %v1103 = vmul.f32 %v1099, 0.5
  %v1104 = vmul.f32 %v1100, 0.5
  %v1105 = vadd.f32 %v1102, 0.5
  %v1106 = vadd.f32 %v1103, 0.5
  %v1107 = vadd.f32 %v1104, 0.5
  %v1108 = vld [vmem:[#allocation2] sm:$0xff]
  %v1109 = vmul.f32 %v1106, %v1108
  %v1110 = vmul.f32 %v1105, %v1101
  %v1111 = vadd.f32 %v1109, %v1110
  %1112 = vst [vmem:[#allocation2] sm:$0xff] %v1111
  %v1113 = vtanh.pop %v1111
  %v1114 = vmul.f32 %v1107, %v1113
  %1115 = vst [vmem:[%s2] sm:$0xff] %v1114
  %s1116 = scalar_lea.vmem %s0, 64
  %v1117 = vld [vmem:[%s1116] sm:$0xff]
  %v1118 = vld [vmem:[%s1116 + $0x8] sm:$0xff]
  %v1119 = vunpack.c.l.bf16 %v1117
  %v1120 = vunpack.c.h.bf16 %v1117
  %v1121 = vunpack.c.l.bf16 %v1118
  %v1122 = vunpack.c.h.bf16 %v1118
  %v1123 = vld [vmem:[%s2] sm:$0xff]
  %v1124 = vpack.c.bf16 %v1123, %v1123
  %v1125 = vld [vmem:[%s1] sm:$0xff]
  %v1126 = vld [vmem:[%s1 + $0x8] sm:$0xff]
  %v1127 = vld [vmem:[%s1 + $0x10] sm:$0xff]
  %v1128 = vld [vmem:[%s1 + $0x18] sm:$0xff]
  %v1129 = vld [vmem:[%s1 + $0x20] sm:$0xff]
  %v1130 = vld [vmem:[%s1 + $0x28] sm:$0xff]
  %v1131 = vld [vmem:[%s1 + $0x30] sm:$0xff]
  %v1132 = vld [vmem:[%s1 + $0x38] sm:$0xff]
  %v1133 = vld [vmem:[%s1 + $0x40] sm:$0xff]
  %v1134 = vld [vmem:[%s1 + $0x48] sm:$0xff]
  %v1135 = vld [vmem:[%s1 + $0x50] sm:$0xff]
  %v1136 = vld [vmem:[%s1 + $0x58] sm:$0xff]
  %v1137 = vld [vmem:[%s1 + $0x60] sm:$0xff]
  %v1138 = vld [vmem:[%s1 + $0x68] sm:$0xff]
  %v1139 = vld [vmem:[%s1 + $0x70] sm:$0xff]
  %v1140 = vld [vmem:[%s1 + $0x78] sm:$0xff]
  %v1141 = vld [vmem:[%s1 + $0x80] sm:$0xff]
  %v1142 = vld [vmem:[%s1 + $0x88] sm:$0xff]
  %v1143 = vld [vmem:[%s1 + $0x90] sm:$0xff]
  %v1144 = vld [vmem:[%s1 + $0x98] sm:$0xff]
  %v1145 = vld [vmem:[%s1 + $0xa0] sm:$0xff]
  %v1146 = vld [vmem:[%s1 + $0xa8] sm:$0xff]
  %v1147 = vld [vmem:[%s1 + $0xb0] sm:$0xff]
  %v1148 = vld [vmem:[%s1 + $0xb8] sm:$0xff]
  %v1149 = vld [vmem:[%s1 + $0xc0] sm:$0xff]
  %v1150 = vld [vmem:[%s1 + $0xc8] sm:$0xff]
  %v1151 = vld [vmem:[%s1 + $0xd0] sm:$0xff]
  %v1152 = vld [vmem:[%s1 + $0xd8] sm:$0xff]
  %v1153 = vld [vmem:[%s1 + $0xe0] sm:$0xff]
  %v1154 = vld [vmem:[%s1 + $0xe8] sm:$0xff]
  %v1155 = vld [vmem:[%s1 + $0xf0] sm:$0xff]
  %v1156 = vld [vmem:[%s1 + $0xf8] sm:$0xff]
  %v1189 = vunpack.c.l.b16 %v1125
  %v1190 = vunpack.c.h.b16 %v1125
  %v1191 = vunpack.c.l.b16 %v1126
  %v1192 = vunpack.c.h.b16 %v1126
  %v1193 = vunpack.c.l.b16 %v1127
  %v1194 = vunpack.c.h.b16 %v1127
  %v1195 = vunpack.c.l.b16 %v1128
  %v1196 = vunpack.c.h.b16 %v1128
  %v1197 = vunpack.c.l.b16 %v1129
  %v1198 = vunpack.c.h.b16 %v1129
  %v1199 = vunpack.c.l.b16 %v1130
  %v1200 = vunpack.c.h.b16 %v1130
  %v1201 = vunpack.c.l.b16 %v1131
  %v1202 = vunpack.c.h.b16 %v1131
  %v1203 = vunpack.c.l.b16 %v1132
  %v1204 = vunpack.c.h.b16 %v1132
  %v1205 = vunpack.c.l.b16 %v1133
  %v1206 = vunpack.c.h.b16 %v1133
  %v1207 = vunpack.c.l.b16 %v1134
  %v1208 = vunpack.c.h.b16 %v1134
  %v1209 = vunpack.c.l.b16 %v1135
  %v1210 = vunpack.c.h.b16 %v1135
  %v1211 = vunpack.c.l.b16 %v1136
  %v1212 = vunpack.c.h.b16 %v1136
  %v1213 = vunpack.c.l.b16 %v1137
  %v1214 = vunpack.c.h.b16 %v1137
  %v1215 = vunpack.c.l.b16 %v1138
  %v1216 = vunpack.c.h.b16 %v1138
  %v1217 = vunpack.c.l.b16 %v1139
  %v1218 = vunpack.c.h.b16 %v1139
  %v1219 = vunpack.c.l.b16 %v1140
  %v1220 = vunpack.c.h.b16 %v1140
  %v1221 = vunpack.c.l.b16 %v1141
  %v1222 = vunpack.c.h.b16 %v1141
  %v1223 = vunpack.c.l.b16 %v1142
  %v1224 = vunpack.c.h.b16 %v1142
  %v1225 = vunpack.c.l.b16 %v1143
  %v1226 = vunpack.c.h.b16 %v1143
  %v1227 = vunpack.c.l.b16 %v1144
  %v1228 = vunpack.c.h.b16 %v1144
  %v1229 = vunpack.c.l.b16 %v1145
  %v1230 = vunpack.c.h.b16 %v1145
  %v1231 = vunpack.c.l.b16 %v1146
  %v1232 = vunpack.c.h.b16 %v1146
  %v1233 = vunpack.c.l.b16 %v1147
  %v1234 = vunpack.c.h.b16 %v1147
  %v1235 = vunpack.c.l.b16 %v1148
  %v1236 = vunpack.c.h.b16 %v1148
  %v1237 = vunpack.c.l.b16 %v1149
  %v1238 = vunpack.c.h.b16 %v1149
  %v1239 = vunpack.c.l.b16 %v1150
  %v1240 = vunpack.c.h.b16 %v1150
  %v1241 = vunpack.c.l.b16 %v1151
  %v1242 = vunpack.c.h.b16 %v1151
  %v1243 = vunpack.c.l.b16 %v1152
  %v1244 = vunpack.c.h.b16 %v1152
  %v1245 = vunpack.c.l.b16 %v1153
  %v1246 = vunpack.c.h.b16 %v1153
  %v1247 = vunpack.c.l.b16 %v1154
  %v1248 = vunpack.c.h.b16 %v1154
  %v1249 = vunpack.c.l.b16 %v1155
  %v1250 = vunpack.c.h.b16 %v1155
  %v1251 = vunpack.c.l.b16 %v1156
  %v1252 = vunpack.c.h.b16 %v1156
  %v1253 = vpack.c.b16 %v1193, %v1189
  %v1254 = vpack.c.b16 %v1194, %v1190
  %v1255 = vpack.c.b16 %v1195, %v1191
  %v1256 = vpack.c.b16 %v1196, %v1192
  %v1257 = vpack.c.b16 %v1201, %v1197
  %v1258 = vpack.c.b16 %v1202, %v1198
  %v1259 = vpack.c.b16 %v1203, %v1199
  %v1260 = vpack.c.b16 %v1204, %v1200
  %v1261 = vpack.c.b16 %v1209, %v1205
  %v1262 = vpack.c.b16 %v1210, %v1206
  %v1263 = vpack.c.b16 %v1211, %v1207
  %v1264 = vpack.c.b16 %v1212, %v1208
  %v1265 = vpack.c.b16 %v1217, %v1213
  %v1266 = vpack.c.b16 %v1218, %v1214
  %v1267 = vpack.c.b16 %v1219, %v1215
  %v1268 = vpack.c.b16 %v1220, %v1216
  %v1269 = vpack.c.b16 %v1225, %v1221
  %v1270 = vpack.c.b16 %v1226, %v1222
  %v1271 = vpack.c.b16 %v1227, %v1223
  %v1272 = vpack.c.b16 %v1228, %v1224
  %v1273 = vpack.c.b16 %v1233, %v1229
  %v1274 = vpack.c.b16 %v1234, %v1230
  %v1275 = vpack.c.b16 %v1235, %v1231
  %v1276 = vpack.c.b16 %v1236, %v1232
  %v1277 = vpack.c.b16 %v1241, %v1237
  %v1278 = vpack.c.b16 %v1242, %v1238
  %v1279 = vpack.c.b16 %v1243, %v1239
  %v1280 = vpack.c.b16 %v1244, %v1240
  %v1281 = vpack.c.b16 %v1249, %v1245
  %v1282 = vpack.c.b16 %v1250, %v1246
  %v1283 = vpack.c.b16 %v1251, %v1247
  %v1284 = vpack.c.b16 %v1252, %v1248
  %1317 = vmatpush.bf16.msra.mxu0 %v1281
  %1318 = vmatpush.bf16.msra.mxu0 %v1277
  %1319 = vmatpush.bf16.msra.mxu0 %v1273
  %1320 = vmatpush.bf16.msra.mxu0 %v1269
  %1321 = vmatpush.bf16.msra.mxu0 %v1265
  %1322 = vmatpush.bf16.msra.mxu0 %v1261
  %1323 = vmatpush.bf16.msra.mxu0 %v1257
  %1324 = vmatpush.bf16.msra.mxu0 %v1253
  %1325 = vmatmul.bf16.gmra.mxu0 %v1124
  %v1326 = vpop.f32.mrf.mxu0
  %v1327 = vadd.f32 0.0, %v1326
  %v1328 = vpop.f32.mrf.mxu0
  %1329 = vdwg.mxu0
  %1330 = vmatpush.bf16.msra.mxu0 %v1282
  %1331 = vmatpush.bf16.msra.mxu0 %v1278
  %1332 = vmatpush.bf16.msra.mxu0 %v1274
  %1333 = vmatpush.bf16.msra.mxu0 %v1270
  %1334 = vmatpush.bf16.msra.mxu0 %v1266
  %1335 = vmatpush.bf16.msra.mxu0 %v1262
  %1336 = vmatpush.bf16.msra.mxu0 %v1258
  %1337 = vmatpush.bf16.msra.mxu0 %v1254
  %1338 = vmatmul.bf16.gmra.mxu0 %v1124
  %v1339 = vpop.f32.mrf.mxu0
  %v1340 = vadd.f32 0.0, %v1339
  %v1341 = vpop.f32.mrf.mxu0
  %1342 = vdwg.mxu0
  %1343 = vmatpush.bf16.msra.mxu0 %v1283
  %1344 = vmatpush.bf16.msra.mxu0 %v1279
  %1345 = vmatpush.bf16.msra.mxu0 %v1275
  %1346 = vmatpush.bf16.msra.mxu0 %v1271
  %1347 = vmatpush.bf16.msra.mxu0 %v1267
  %1348 = vmatpush.bf16.msra.mxu0 %v1263
  %1349 = vmatpush.bf16.msra.mxu0 %v1259
  %1350 = vmatpush.bf16.msra.mxu0 %v1255
  %1351 = vmatmul.bf16.gmra.mxu0 %v1124
  %v1352 = vpop.f32.mrf.mxu0
  %v1353 = vadd.f32 0.0, %v1352
  %v1354 = vpop.f32.mrf.mxu0
  %1355 = vdwg.mxu0
  %1356 = vmatpush.bf16.msra.mxu0 %v1284
  %1357 = vmatpush.bf16.msra.mxu0 %v1280
  %1358 = vmatpush.bf16.msra.mxu0 %v1276
  %1359 = vmatpush.bf16.msra.mxu0 %v1272
  %1360 = vmatpush.bf16.msra.mxu0 %v1268
  %1361 = vmatpush.bf16.msra.mxu0 %v1264
  %1362 = vmatpush.bf16.msra.mxu0 %v1260
  %1363 = vmatpush.bf16.msra.mxu0 %v1256
  %1364 = vmatmul.bf16.gmra.mxu0 %v1124
  %v1365 = vpop.f32.mrf.mxu0
  %v1366 = vadd.f32 0.0, %v1365
  %v1367 = vpop.f32.mrf.mxu0
  %1368 = vdwg.mxu0
  %v1369 = vadd.f32 %v1119, %v1327
  %v1370 = vadd.f32 %v1120, %v1340
  %v1371 = vadd.f32 %v1121, %v1353
  %v1372 = vadd.f32 %v1122, %v1366
  %v1373 = vtanh.pop %v1369
  %v1374 = vtanh.pop %v1370
  %v1375 = vtanh.pop %v1371
  %v1376 = vtanh.pop %v1372
  %v1377 = vmul.f32 %v1373, 0.5
  %v1378 = vmul.f32 %v1374, 0.5
  %v1379 = vmul.f32 %v1375, 0.5
  %v1380 = vadd.f32 %v1377, 0.5
  %v1381 = vadd.f32 %v1378, 0.5
  %v1382 = vadd.f32 %v1379, 0.5
  %v1383 = vld [vmem:[#allocation2] sm:$0xff]
  %v1384 = vmul.f32 %v1381, %v1383
  %v1385 = vmul.f32 %v1380, %v1376
  %v1386 = vadd.f32 %v1384, %v1385
  %1387 = vst [vmem:[#allocation2] sm:$0xff] %v1386
  %v1388 = vtanh.pop %v1386
  %v1389 = vmul.f32 %v1382, %v1388
  %1390 = vst [vmem:[%s2] sm:$0xff] %v1389
  %s1391 = scalar_lea.vmem %s0, 80
  %v1392 = vld [vmem:[%s1391] sm:$0xff]
  %v1393 = vld [vmem:[%s1391 + $0x8] sm:$0xff]
  %v1394 = vunpack.c.l.bf16 %v1392
  %v1395 = vunpack.c.h.bf16 %v1392
  %v1396 = vunpack.c.l.bf16 %v1393
  %v1397 = vunpack.c.h.bf16 %v1393
  %v1398 = vld [vmem:[%s2] sm:$0xff]
  %v1399 = vpack.c.bf16 %v1398, %v1398
  %v1400 = vld [vmem:[%s1] sm:$0xff]
  %v1401 = vld [vmem:[%s1 + $0x8] sm:$0xff]
  %v1402 = vld [vmem:[%s1 + $0x10] sm:$0xff]
  %v1403 = vld [vmem:[%s1 + $0x18] sm:$0xff]
  %v1404 = vld [vmem:[%s1 + $0x20] sm:$0xff]
  %v1405 = vld [vmem:[%s1 + $0x28] sm:$0xff]
  %v1406 = vld [vmem:[%s1 + $0x30] sm:$0xff]
  %v1407 = vld [vmem:[%s1 + $0x38] sm:$0xff]
  %v1408 = vld [vmem:[%s1 + $0x40] sm:$0xff]
  %v1409 = vld [vmem:[%s1 + $0x48] sm:$0xff]
  %v1410 = vld [vmem:[%s1 + $0x50] sm:$0xff]
  %v1411 = vld [vmem:[%s1 + $0x58] sm:$0xff]
  %v1412 = vld [vmem:[%s1 + $0x60] sm:$0xff]
  %v1413 = vld [vmem:[%s1 + $0x68] sm:$0xff]
  %v1414 = vld [vmem:[%s1 + $0x70] sm:$0xff]
  %v1415 = vld [vmem:[%s1 + $0x78] sm:$0xff]
  %v1416 = vld [vmem:[%s1 + $0x80] sm:$0xff]
  %v1417 = vld [vmem:[%s1 + $0x88] sm:$0xff]
  %v1418 = vld [vmem:[%s1 + $0x90] sm:$0xff]
  %v1419 = vld [vmem:[%s1 + $0x98] sm:$0xff]
  %v1420 = vld [vmem:[%s1 + $0xa0] sm:$0xff]
  %v1421 = vld [vmem:[%s1 + $0xa8] sm:$0xff]
  %v1422 = vld [vmem:[%s1 + $0xb0] sm:$0xff]
  %v1423 = vld [vmem:[%s1 + $0xb8] sm:$0xff]
  %v1424 = vld [vmem:[%s1 + $0xc0] sm:$0xff]
  %v1425 = vld [vmem:[%s1 + $0xc8] sm:$0xff]
  %v1426 = vld [vmem:[%s1 + $0xd0] sm:$0xff]
  %v1427 = vld [vmem:[%s1 + $0xd8] sm:$0xff]
  %v1428 = vld [vmem:[%s1 + $0xe0] sm:$0xff]
  %v1429 = vld [vmem:[%s1 + $0xe8] sm:$0xff]
  %v1430 = vld [vmem:[%s1 + $0xf0] sm:$0xff]
  %v1431 = vld [vmem:[%s1 + $0xf8] sm:$0xff]
  %v1464 = vunpack.c.l.b16 %v1400
  %v1465 = vunpack.c.h.b16 %v1400
  %v1466 = vunpack.c.l.b16 %v1401
  %v1467 = vunpack.c.h.b16 %v1401
  %v1468 = vunpack.c.l.b16 %v1402
  %v1469 = vunpack.c.h.b16 %v1402
  %v1470 = vunpack.c.l.b16 %v1403
  %v1471 = vunpack.c.h.b16 %v1403
  %v1472 = vunpack.c.l.b16 %v1404
  %v1473 = vunpack.c.h.b16 %v1404
  %v1474 = vunpack.c.l.b16 %v1405
  %v1475 = vunpack.c.h.b16 %v1405
  %v1476 = vunpack.c.l.b16 %v1406
  %v1477 = vunpack.c.h.b16 %v1406
  %v1478 = vunpack.c.l.b16 %v1407
  %v1479 = vunpack.c.h.b16 %v1407
  %v1480 = vunpack.c.l.b16 %v1408
  %v1481 = vunpack.c.h.b16 %v1408
  %v1482 = vunpack.c.l.b16 %v1409
  %v1483 = vunpack.c.h.b16 %v1409
  %v1484 = vunpack.c.l.b16 %v1410
  %v1485 = vunpack.c.h.b16 %v1410
  %v1486 = vunpack.c.l.b16 %v1411
  %v1487 = vunpack.c.h.b16 %v1411
  %v1488 = vunpack.c.l.b16 %v1412
  %v1489 = vunpack.c.h.b16 %v1412
  %v1490 = vunpack.c.l.b16 %v1413
  %v1491 = vunpack.c.h.b16 %v1413
  %v1492 = vunpack.c.l.b16 %v1414
  %v1493 = vunpack.c.h.b16 %v1414
  %v1494 = vunpack.c.l.b16 %v1415
  %v1495 = vunpack.c.h.b16 %v1415
  %v1496 = vunpack.c.l.b16 %v1416
  %v1497 = vunpack.c.h.b16 %v1416
  %v1498 = vunpack.c.l.b16 %v1417
  %v1499 = vunpack.c.h.b16 %v1417
  %v1500 = vunpack.c.l.b16 %v1418
  %v1501 = vunpack.c.h.b16 %v1418
  %v1502 = vunpack.c.l.b16 %v1419
  %v1503 = vunpack.c.h.b16 %v1419
  %v1504 = vunpack.c.l.b16 %v1420
  %v1505 = vunpack.c.h.b16 %v1420
  %v1506 = vunpack.c.l.b16 %v1421
  %v1507 = vunpack.c.h.b16 %v1421
  %v1508 = vunpack.c.l.b16 %v1422
  %v1509 = vunpack.c.h.b16 %v1422
  %v1510 = vunpack.c.l.b16 %v1423
  %v1511 = vunpack.c.h.b16 %v1423
  %v1512 = vunpack.c.l.b16 %v1424
  %v1513 = vunpack.c.h.b16 %v1424
  %v1514 = vunpack.c.l.b16 %v1425
  %v1515 = vunpack.c.h.b16 %v1425
  %v1516 = vunpack.c.l.b16 %v1426
  %v1517 = vunpack.c.h.b16 %v1426
  %v1518 = vunpack.c.l.b16 %v1427
  %v1519 = vunpack.c.h.b16 %v1427
  %v1520 = vunpack.c.l.b16 %v1428
  %v1521 = vunpack.c.h.b16 %v1428
  %v1522 = vunpack.c.l.b16 %v1429
  %v1523 = vunpack.c.h.b16 %v1429
  %v1524 = vunpack.c.l.b16 %v1430
  %v1525 = vunpack.c.h.b16 %v1430
  %v1526 = vunpack.c.l.b16 %v1431
  %v1527 = vunpack.c.h.b16 %v1431
  %v1528 = vpack.c.b16 %v1468, %v1464
  %v1529 = vpack.c.b16 %v1469, %v1465
  %v1530 = vpack.c.b16 %v1470, %v1466
  %v1531 = vpack.c.b16 %v1471, %v1467
  %v1532 = vpack.c.b16 %v1476, %v1472
  %v1533 = vpack.c.b16 %v1477, %v1473
  %v1534 = vpack.c.b16 %v1478, %v1474
  %v1535 = vpack.c.b16 %v1479, %v1475
  %v1536 = vpack.c.b16 %v1484, %v1480
  %v1537 = vpack.c.b16 %v1485, %v1481
  %v1538 = vpack.c.b16 %v1486, %v1482
  %v1539 = vpack.c.b16 %v1487, %v1483
  %v1540 = vpack.c.b16 %v1492, %v1488
  %v1541 = vpack.c.b16 %v1493, %v1489
  %v1542 = vpack.c.b16 %v1494, %v1490
  %v1543 = vpack.c.b16 %v1495, %v1491
  %v1544 = vpack.c.b16 %v1500, %v1496
  %v1545 = vpack.c.b16 %v1501, %v1497
  %v1546 = vpack.c.b16 %v1502, %v1498
  %v1547 = vpack.c.b16 %v1503, %v1499
  %v1548 = vpack.c.b16 %v1508, %v1504
  %v1549 = vpack.c.b16 %v1509, %v1505
  %v1550 = vpack.c.b16 %v1510, %v1506
  %v1551 = vpack.c.b16 %v1511, %v1507
  %v1552 = vpack.c.b16 %v1516, %v1512
  %v1553 = vpack.c.b16 %v1517, %v1513
  %v1554 = vpack.c.b16 %v1518, %v1514
  %v1555 = vpack.c.b16 %v1519, %v1515
  %v1556 = vpack.c.b16 %v1524, %v1520
  %v1557 = vpack.c.b16 %v1525, %v1521
  %v1558 = vpack.c.b16 %v1526, %v1522
  %v1559 = vpack.c.b16 %v1527, %v1523
  %1592 = vmatpush.bf16.msra.mxu0 %v1556
  %1593 = vmatpush.bf16.msra.mxu0 %v1552
  %1594 = vmatpush.bf16.msra.mxu0 %v1548
  %1595 = vmatpush.bf16.msra.mxu0 %v1544
  %1596 = vmatpush.bf16.msra.mxu0 %v1540
  %1597 = vmatpush.bf16.msra.mxu0 %v1536
  %1598 = vmatpush.bf16.msra.mxu0 %v1532
  %1599 = vmatpush.bf16.msra.mxu0 %v1528
  %1600 = vmatmul.bf16.gmra.mxu0 %v1399
  %v1601 = vpop.f32.mrf.mxu0
  %v1602 = vadd.f32 0.0, %v1601
  %v1603 = vpop.f32.mrf.mxu0
  %1604 = vdwg.mxu0
  %1605 = vmatpush.bf16.msra.mxu0 %v1557
  %1606 = vmatpush.bf16.msra.mxu0 %v1553
  %1607 = vmatpush.bf16.msra.mxu0 %v1549
  %1608 = vmatpush.bf16.msra.mxu0 %v1545
  %1609 = vmatpush.bf16.msra.mxu0 %v1541
  %1610 = vmatpush.bf16.msra.mxu0 %v1537
  %1611 = vmatpush.bf16.msra.mxu0 %v1533
  %1612 = vmatpush.bf16.msra.mxu0 %v1529
  %1613 = vmatmul.bf16.gmra.mxu0 %v1399
  %v1614 = vpop.f32.mrf.mxu0
  %v1615 = vadd.f32 0.0, %v1614
  %v1616 = vpop.f32.mrf.mxu0
  %1617 = vdwg.mxu0
  %1618 = vmatpush.bf16.msra.mxu0 %v1558
  %1619 = vmatpush.bf16.msra.mxu0 %v1554
  %1620 = vmatpush.bf16.msra.mxu0 %v1550
  %1621 = vmatpush.bf16.msra.mxu0 %v1546
  %1622 = vmatpush.bf16.msra.mxu0 %v1542
  %1623 = vmatpush.bf16.msra.mxu0 %v1538
  %1624 = vmatpush.bf16.msra.mxu0 %v1534
  %1625 = vmatpush.bf16.msra.mxu0 %v1530
  %1626 = vmatmul.bf16.gmra.mxu0 %v1399
  %v1627 = vpop.f32.mrf.mxu0
  %v1628 = vadd.f32 0.0, %v1627
  %v1629 = vpop.f32.mrf.mxu0
  %1630 = vdwg.mxu0
  %1631 = vmatpush.bf16.msra.mxu0 %v1559
  %1632 = vmatpush.bf16.msra.mxu0 %v1555
  %1633 = vmatpush.bf16.msra.mxu0 %v1551
  %1634 = vmatpush.bf16.msra.mxu0 %v1547
  %1635 = vmatpush.bf16.msra.mxu0 %v1543
  %1636 = vmatpush.bf16.msra.mxu0 %v1539
  %1637 = vmatpush.bf16.msra.mxu0 %v1535
  %1638 = vmatpush.bf16.msra.mxu0 %v1531
  %1639 = vmatmul.bf16.gmra.mxu0 %v1399
  %v1640 = vpop.f32.mrf.mxu0
  %v1641 = vadd.f32 0.0, %v1640
  %v1642 = vpop.f32.mrf.mxu0
  %1643 = vdwg.mxu0
  %v1644 = vadd.f32 %v1394, %v1602
  %v1645 = vadd.f32 %v1395, %v1615
  %v1646 = vadd.f32 %v1396, %v1628
  %v1647 = vadd.f32 %v1397, %v1641
  %v1648 = vtanh.pop %v1644
  %v1649 = vtanh.pop %v1645
  %v1650 = vtanh.pop %v1646
  %v1651 = vtanh.pop %v1647
  %v1652 = vmul.f32 %v1648, 0.5
  %v1653 = vmul.f32 %v1649, 0.5
  %v1654 = vmul.f32 %v1650, 0.5
  %v1655 = vadd.f32 %v1652, 0.5
  %v1656 = vadd.f32 %v1653, 0.5
  %v1657 = vadd.f32 %v1654, 0.5
  %v1658 = vld [vmem:[#allocation2] sm:$0xff]
  %v1659 = vmul.f32 %v1656, %v1658
  %v1660 = vmul.f32 %v1655, %v1651
  %v1661 = vadd.f32 %v1659, %v1660
  %1662 = vst [vmem:[#allocation2] sm:$0xff] %v1661
  %v1663 = vtanh.pop %v1661
  %v1664 = vmul.f32 %v1657, %v1663
  %1665 = vst [vmem:[%s2] sm:$0xff] %v1664
  %s1666 = scalar_lea.vmem %s0, 96
  %v1667 = vld [vmem:[%s1666] sm:$0xff]
  %v1668 = vld [vmem:[%s1666 + $0x8] sm:$0xff]
  %v1669 = vunpack.c.l.bf16 %v1667
  %v1670 = vunpack.c.h.bf16 %v1667
  %v1671 = vunpack.c.l.bf16 %v1668
  %v1672 = vunpack.c.h.bf16 %v1668
  %v1673 = vld [vmem:[%s2] sm:$0xff]
  %v1674 = vpack.c.bf16 %v1673, %v1673
  %v1675 = vld [vmem:[%s1] sm:$0xff]
  %v1676 = vld [vmem:[%s1 + $0x8] sm:$0xff]
  %v1677 = vld [vmem:[%s1 + $0x10] sm:$0xff]
  %v1678 = vld [vmem:[%s1 + $0x18] sm:$0xff]
  %v1679 = vld [vmem:[%s1 + $0x20] sm:$0xff]
  %v1680 = vld [vmem:[%s1 + $0x28] sm:$0xff]
  %v1681 = vld [vmem:[%s1 + $0x30] sm:$0xff]
  %v1682 = vld [vmem:[%s1 + $0x38] sm:$0xff]
  %v1683 = vld [vmem:[%s1 + $0x40] sm:$0xff]
  %v1684 = vld [vmem:[%s1 + $0x48] sm:$0xff]
  %v1685 = vld [vmem:[%s1 + $0x50] sm:$0xff]
  %v1686 = vld [vmem:[%s1 + $0x58] sm:$0xff]
  %v1687 = vld [vmem:[%s1 + $0x60] sm:$0xff]
  %v1688 = vld [vmem:[%s1 + $0x68] sm:$0xff]
  %v1689 = vld [vmem:[%s1 + $0x70] sm:$0xff]
  %v1690 = vld [vmem:[%s1 + $0x78] sm:$0xff]
  %v1691 = vld [vmem:[%s1 + $0x80] sm:$0xff]
  %v1692 = vld [vmem:[%s1 + $0x88] sm:$0xff]
  %v1693 = vld [vmem:[%s1 + $0x90] sm:$0xff]
  %v1694 = vld [vmem:[%s1 + $0x98] sm:$0xff]
  %v1695 = vld [vmem:[%s1 + $0xa0] sm:$0xff]
  %v1696 = vld [vmem:[%s1 + $0xa8] sm:$0xff]
  %v1697 = vld [vmem:[%s1 + $0xb0] sm:$0xff]
  %v1698 = vld [vmem:[%s1 + $0xb8] sm:$0xff]
  %v1699 = vld [vmem:[%s1 + $0xc0] sm:$0xff]
  %v1700 = vld [vmem:[%s1 + $0xc8] sm:$0xff]
  %v1701 = vld [vmem:[%s1 + $0xd0] sm:$0xff]
  %v1702 = vld [vmem:[%s1 + $0xd8] sm:$0xff]
  %v1703 = vld [vmem:[%s1 + $0xe0] sm:$0xff]
  %v1704 = vld [vmem:[%s1 + $0xe8] sm:$0xff]
  %v1705 = vld [vmem:[%s1 + $0xf0] sm:$0xff]
  %v1706 = vld [vmem:[%s1 + $0xf8] sm:$0xff]
  %v1739 = vunpack.c.l.b16 %v1675
  %v1740 = vunpack.c.h.b16 %v1675
  %v1741 = vunpack.c.l.b16 %v1676
  %v1742 = vunpack.c.h.b16 %v1676
  %v1743 = vunpack.c.l.b16 %v1677
  %v1744 = vunpack.c.h.b16 %v1677
  %v1745 = vunpack.c.l.b16 %v1678
  %v1746 = vunpack.c.h.b16 %v1678
  %v1747 = vunpack.c.l.b16 %v1679
  %v1748 = vunpack.c.h.b16 %v1679
  %v1749 = vunpack.c.l.b16 %v1680
  %v1750 = vunpack.c.h.b16 %v1680
  %v1751 = vunpack.c.l.b16 %v1681
  %v1752 = vunpack.c.h.b16 %v1681
  %v1753 = vunpack.c.l.b16 %v1682
  %v1754 = vunpack.c.h.b16 %v1682
  %v1755 = vunpack.c.l.b16 %v1683
  %v1756 = vunpack.c.h.b16 %v1683
  %v1757 = vunpack.c.l.b16 %v1684
  %v1758 = vunpack.c.h.b16 %v1684
  %v1759 = vunpack.c.l.b16 %v1685
  %v1760 = vunpack.c.h.b16 %v1685
  %v1761 = vunpack.c.l.b16 %v1686
  %v1762 = vunpack.c.h.b16 %v1686
  %v1763 = vunpack.c.l.b16 %v1687
  %v1764 = vunpack.c.h.b16 %v1687
  %v1765 = vunpack.c.l.b16 %v1688
  %v1766 = vunpack.c.h.b16 %v1688
  %v1767 = vunpack.c.l.b16 %v1689
  %v1768 = vunpack.c.h.b16 %v1689
  %v1769 = vunpack.c.l.b16 %v1690
  %v1770 = vunpack.c.h.b16 %v1690
  %v1771 = vunpack.c.l.b16 %v1691
  %v1772 = vunpack.c.h.b16 %v1691
  %v1773 = vunpack.c.l.b16 %v1692
  %v1774 = vunpack.c.h.b16 %v1692
  %v1775 = vunpack.c.l.b16 %v1693
  %v1776 = vunpack.c.h.b16 %v1693
  %v1777 = vunpack.c.l.b16 %v1694
  %v1778 = vunpack.c.h.b16 %v1694
  %v1779 = vunpack.c.l.b16 %v1695
  %v1780 = vunpack.c.h.b16 %v1695
  %v1781 = vunpack.c.l.b16 %v1696
  %v1782 = vunpack.c.h.b16 %v1696
  %v1783 = vunpack.c.l.b16 %v1697
  %v1784 = vunpack.c.h.b16 %v1697
  %v1785 = vunpack.c.l.b16 %v1698
  %v1786 = vunpack.c.h.b16 %v1698
  %v1787 = vunpack.c.l.b16 %v1699
  %v1788 = vunpack.c.h.b16 %v1699
  %v1789 = vunpack.c.l.b16 %v1700
  %v1790 = vunpack.c.h.b16 %v1700
  %v1791 = vunpack.c.l.b16 %v1701
  %v1792 = vunpack.c.h.b16 %v1701
  %v1793 = vunpack.c.l.b16 %v1702
  %v1794 = vunpack.c.h.b16 %v1702
  %v1795 = vunpack.c.l.b16 %v1703
  %v1796 = vunpack.c.h.b16 %v1703
  %v1797 = vunpack.c.l.b16 %v1704
  %v1798 = vunpack.c.h.b16 %v1704
  %v1799 = vunpack.c.l.b16 %v1705
  %v1800 = vunpack.c.h.b16 %v1705
  %v1801 = vunpack.c.l.b16 %v1706
  %v1802 = vunpack.c.h.b16 %v1706
  %v1803 = vpack.c.b16 %v1743, %v1739
  %v1804 = vpack.c.b16 %v1744, %v1740
  %v1805 = vpack.c.b16 %v1745, %v1741
  %v1806 = vpack.c.b16 %v1746, %v1742
  %v1807 = vpack.c.b16 %v1751, %v1747
  %v1808 = vpack.c.b16 %v1752, %v1748
  %v1809 = vpack.c.b16 %v1753, %v1749
  %v1810 = vpack.c.b16 %v1754, %v1750
  %v1811 = vpack.c.b16 %v1759, %v1755
  %v1812 = vpack.c.b16 %v1760, %v1756
  %v1813 = vpack.c.b16 %v1761, %v1757
  %v1814 = vpack.c.b16 %v1762, %v1758
  %v1815 = vpack.c.b16 %v1767, %v1763
  %v1816 = vpack.c.b16 %v1768, %v1764
  %v1817 = vpack.c.b16 %v1769, %v1765
  %v1818 = vpack.c.b16 %v1770, %v1766
  %v1819 = vpack.c.b16 %v1775, %v1771
  %v1820 = vpack.c.b16 %v1776, %v1772
  %v1821 = vpack.c.b16 %v1777, %v1773
  %v1822 = vpack.c.b16 %v1778, %v1774
  %v1823 = vpack.c.b16 %v1783, %v1779
  %v1824 = vpack.c.b16 %v1784, %v1780
  %v1825 = vpack.c.b16 %v1785, %v1781
  %v1826 = vpack.c.b16 %v1786, %v1782
  %v1827 = vpack.c.b16 %v1791, %v1787
  %v1828 = vpack.c.b16 %v1792, %v1788
  %v1829 = vpack.c.b16 %v1793, %v1789
  %v1830 = vpack.c.b16 %v1794, %v1790
  %v1831 = vpack.c.b16 %v1799, %v1795
  %v1832 = vpack.c.b16 %v1800, %v1796
  %v1833 = vpack.c.b16 %v1801, %v1797
  %v1834 = vpack.c.b16 %v1802, %v1798
  %1867 = vmatpush.bf16.msra.mxu0 %v1831
  %1868 = vmatpush.bf16.msra.mxu0 %v1827
  %1869 = vmatpush.bf16.msra.mxu0 %v1823
  %1870 = vmatpush.bf16.msra.mxu0 %v1819
  %1871 = vmatpush.bf16.msra.mxu0 %v1815
  %1872 = vmatpush.bf16.msra.mxu0 %v1811
  %1873 = vmatpush.bf16.msra.mxu0 %v1807
  %1874 = vmatpush.bf16.msra.mxu0 %v1803
  %1875 = vmatmul.bf16.gmra.mxu0 %v1674
  %v1876 = vpop.f32.mrf.mxu0
  %v1877 = vadd.f32 0.0, %v1876
  %v1878 = vpop.f32.mrf.mxu0
  %1879 = vdwg.mxu0
  %1880 = vmatpush.bf16.msra.mxu0 %v1832
  %1881 = vmatpush.bf16.msra.mxu0 %v1828
  %1882 = vmatpush.bf16.msra.mxu0 %v1824
  %1883 = vmatpush.bf16.msra.mxu0 %v1820
  %1884 = vmatpush.bf16.msra.mxu0 %v1816
  %1885 = vmatpush.bf16.msra.mxu0 %v1812
  %1886 = vmatpush.bf16.msra.mxu0 %v1808
  %1887 = vmatpush.bf16.msra.mxu0 %v1804
  %1888 = vmatmul.bf16.gmra.mxu0 %v1674
  %v1889 = vpop.f32.mrf.mxu0
  %v1890 = vadd.f32 0.0, %v1889
  %v1891 = vpop.f32.mrf.mxu0
  %1892 = vdwg.mxu0
  %1893 = vmatpush.bf16.msra.mxu0 %v1833
  %1894 = vmatpush.bf16.msra.mxu0 %v1829
  %1895 = vmatpush.bf16.msra.mxu0 %v1825
  %1896 = vmatpush.bf16.msra.mxu0 %v1821
  %1897 = vmatpush.bf16.msra.mxu0 %v1817
  %1898 = vmatpush.bf16.msra.mxu0 %v1813
  %1899 = vmatpush.bf16.msra.mxu0 %v1809
  %1900 = vmatpush.bf16.msra.mxu0 %v1805
  %1901 = vmatmul.bf16.gmra.mxu0 %v1674
  %v1902 = vpop.f32.mrf.mxu0
  %v1903 = vadd.f32 0.0, %v1902
  %v1904 = vpop.f32.mrf.mxu0
  %1905 = vdwg.mxu0
  %1906 = vmatpush.bf16.msra.mxu0 %v1834
  %1907 = vmatpush.bf16.msra.mxu0 %v1830
  %1908 = vmatpush.bf16.msra.mxu0 %v1826
  %1909 = vmatpush.bf16.msra.mxu0 %v1822
  %1910 = vmatpush.bf16.msra.mxu0 %v1818
  %1911 = vmatpush.bf16.msra.mxu0 %v1814
  %1912 = vmatpush.bf16.msra.mxu0 %v1810
  %1913 = vmatpush.bf16.msra.mxu0 %v1806
  %1914 = vmatmul.bf16.gmra.mxu0 %v1674
  %v1915 = vpop.f32.mrf.mxu0
  %v1916 = vadd.f32 0.0, %v1915
  %v1917 = vpop.f32.mrf.mxu0
  %1918 = vdwg.mxu0
  %v1919 = vadd.f32 %v1669, %v1877
  %v1920 = vadd.f32 %v1670, %v1890
  %v1921 = vadd.f32 %v1671, %v1903
  %v1922 = vadd.f32 %v1672, %v1916
  %v1923 = vtanh.pop %v1919
  %v1924 = vtanh.pop %v1920
  %v1925 = vtanh.pop %v1921
  %v1926 = vtanh.pop %v1922
  %v1927 = vmul.f32 %v1923, 0.5
  %v1928 = vmul.f32 %v1924, 0.5
  %v1929 = vmul.f32 %v1925, 0.5
  %v1930 = vadd.f32 %v1927, 0.5
  %v1931 = vadd.f32 %v1928, 0.5
  %v1932 = vadd.f32 %v1929, 0.5
  %v1933 = vld [vmem:[#allocation2] sm:$0xff]
  %v1934 = vmul.f32 %v1931, %v1933
  %v1935 = vmul.f32 %v1930, %v1926
  %v1936 = vadd.f32 %v1934, %v1935
  %1937 = vst [vmem:[#allocation2] sm:$0xff] %v1936
  %v1938 = vtanh.pop %v1936
  %v1939 = vmul.f32 %v1932, %v1938
  %1940 = vst [vmem:[%s2] sm:$0xff] %v1939
  %s1941 = scalar_lea.vmem %s0, 112
  %v1942 = vld [vmem:[%s1941] sm:$0xff]
  %v1943 = vld [vmem:[%s1941 + $0x8] sm:$0xff]
  %v1944 = vunpack.c.l.bf16 %v1942
  %v1945 = vunpack.c.h.bf16 %v1942
  %v1946 = vunpack.c.l.bf16 %v1943
  %v1947 = vunpack.c.h.bf16 %v1943
  %v1948 = vld [vmem:[%s2] sm:$0xff]
  %v1949 = vpack.c.bf16 %v1948, %v1948
  %v1950 = vld [vmem:[%s1] sm:$0xff]
  %v1951 = vld [vmem:[%s1 + $0x8] sm:$0xff]
  %v1952 = vld [vmem:[%s1 + $0x10] sm:$0xff]
  %v1953 = vld [vmem:[%s1 + $0x18] sm:$0xff]
  %v1954 = vld [vmem:[%s1 + $0x20] sm:$0xff]
  %v1955 = vld [vmem:[%s1 + $0x28] sm:$0xff]
  %v1956 = vld [vmem:[%s1 + $0x30] sm:$0xff]
  %v1957 = vld [vmem:[%s1 + $0x38] sm:$0xff]
  %v1958 = vld [vmem:[%s1 + $0x40] sm:$0xff]
  %v1959 = vld [vmem:[%s1 + $0x48] sm:$0xff]
  %v1960 = vld [vmem:[%s1 + $0x50] sm:$0xff]
  %v1961 = vld [vmem:[%s1 + $0x58] sm:$0xff]
  %v1962 = vld [vmem:[%s1 + $0x60] sm:$0xff]
  %v1963 = vld [vmem:[%s1 + $0x68] sm:$0xff]
  %v1964 = vld [vmem:[%s1 + $0x70] sm:$0xff]
  %v1965 = vld [vmem:[%s1 + $0x78] sm:$0xff]
  %v1966 = vld [vmem:[%s1 + $0x80] sm:$0xff]
  %v1967 = vld [vmem:[%s1 + $0x88] sm:$0xff]
  %v1968 = vld [vmem:[%s1 + $0x90] sm:$0xff]
  %v1969 = vld [vmem:[%s1 + $0x98] sm:$0xff]
  %v1970 = vld [vmem:[%s1 + $0xa0] sm:$0xff]
  %v1971 = vld [vmem:[%s1 + $0xa8] sm:$0xff]
  %v1972 = vld [vmem:[%s1 + $0xb0] sm:$0xff]
  %v1973 = vld [vmem:[%s1 + $0xb8] sm:$0xff]
  %v1974 = vld [vmem:[%s1 + $0xc0] sm:$0xff]
  %v1975 = vld [vmem:[%s1 + $0xc8] sm:$0xff]
  %v1976 = vld [vmem:[%s1 + $0xd0] sm:$0xff]
  %v1977 = vld [vmem:[%s1 + $0xd8] sm:$0xff]
  %v1978 = vld [vmem:[%s1 + $0xe0] sm:$0xff]
  %v1979 = vld [vmem:[%s1 + $0xe8] sm:$0xff]
  %v1980 = vld [vmem:[%s1 + $0xf0] sm:$0xff]
  %v1981 = vld [vmem:[%s1 + $0xf8] sm:$0xff]
  %v2014 = vunpack.c.l.b16 %v1950
  %v2015 = vunpack.c.h.b16 %v1950
  %v2016 = vunpack.c.l.b16 %v1951
  %v2017 = vunpack.c.h.b16 %v1951
  %v2018 = vunpack.c.l.b16 %v1952
  %v2019 = vunpack.c.h.b16 %v1952
  %v2020 = vunpack.c.l.b16 %v1953
  %v2021 = vunpack.c.h.b16 %v1953
  %v2022 = vunpack.c.l.b16 %v1954
  %v2023 = vunpack.c.h.b16 %v1954
  %v2024 = vunpack.c.l.b16 %v1955
  %v2025 = vunpack.c.h.b16 %v1955
  %v2026 = vunpack.c.l.b16 %v1956
  %v2027 = vunpack.c.h.b16 %v1956
  %v2028 = vunpack.c.l.b16 %v1957
  %v2029 = vunpack.c.h.b16 %v1957
  %v2030 = vunpack.c.l.b16 %v1958
  %v2031 = vunpack.c.h.b16 %v1958
  %v2032 = vunpack.c.l.b16 %v1959
  %v2033 = vunpack.c.h.b16 %v1959
  %v2034 = vunpack.c.l.b16 %v1960
  %v2035 = vunpack.c.h.b16 %v1960
  %v2036 = vunpack.c.l.b16 %v1961
  %v2037 = vunpack.c.h.b16 %v1961
  %v2038 = vunpack.c.l.b16 %v1962
  %v2039 = vunpack.c.h.b16 %v1962
  %v2040 = vunpack.c.l.b16 %v1963
  %v2041 = vunpack.c.h.b16 %v1963
  %v2042 = vunpack.c.l.b16 %v1964
  %v2043 = vunpack.c.h.b16 %v1964
  %v2044 = vunpack.c.l.b16 %v1965
  %v2045 = vunpack.c.h.b16 %v1965
  %v2046 = vunpack.c.l.b16 %v1966
  %v2047 = vunpack.c.h.b16 %v1966
  %v2048 = vunpack.c.l.b16 %v1967
  %v2049 = vunpack.c.h.b16 %v1967
  %v2050 = vunpack.c.l.b16 %v1968
  %v2051 = vunpack.c.h.b16 %v1968
  %v2052 = vunpack.c.l.b16 %v1969
  %v2053 = vunpack.c.h.b16 %v1969
  %v2054 = vunpack.c.l.b16 %v1970
  %v2055 = vunpack.c.h.b16 %v1970
  %v2056 = vunpack.c.l.b16 %v1971
  %v2057 = vunpack.c.h.b16 %v1971
  %v2058 = vunpack.c.l.b16 %v1972
  %v2059 = vunpack.c.h.b16 %v1972
  %v2060 = vunpack.c.l.b16 %v1973
  %v2061 = vunpack.c.h.b16 %v1973
  %v2062 = vunpack.c.l.b16 %v1974
  %v2063 = vunpack.c.h.b16 %v1974
  %v2064 = vunpack.c.l.b16 %v1975
  %v2065 = vunpack.c.h.b16 %v1975
  %v2066 = vunpack.c.l.b16 %v1976
  %v2067 = vunpack.c.h.b16 %v1976
  %v2068 = vunpack.c.l.b16 %v1977
  %v2069 = vunpack.c.h.b16 %v1977
  %v2070 = vunpack.c.l.b16 %v1978
  %v2071 = vunpack.c.h.b16 %v1978
  %v2072 = vunpack.c.l.b16 %v1979
  %v2073 = vunpack.c.h.b16 %v1979
  %v2074 = vunpack.c.l.b16 %v1980
  %v2075 = vunpack.c.h.b16 %v1980
  %v2076 = vunpack.c.l.b16 %v1981
  %v2077 = vunpack.c.h.b16 %v1981
  %v2078 = vpack.c.b16 %v2018, %v2014
  %v2079 = vpack.c.b16 %v2019, %v2015
  %v2080 = vpack.c.b16 %v2020, %v2016
  %v2081 = vpack.c.b16 %v2021, %v2017
  %v2082 = vpack.c.b16 %v2026, %v2022
  %v2083 = vpack.c.b16 %v2027, %v2023
  %v2084 = vpack.c.b16 %v2028, %v2024
  %v2085 = vpack.c.b16 %v2029, %v2025
  %v2086 = vpack.c.b16 %v2034, %v2030
  %v2087 = vpack.c.b16 %v2035, %v2031
  %v2088 = vpack.c.b16 %v2036, %v2032
  %v2089 = vpack.c.b16 %v2037, %v2033
  %v2090 = vpack.c.b16 %v2042, %v2038
  %v2091 = vpack.c.b16 %v2043, %v2039
  %v2092 = vpack.c.b16 %v2044, %v2040
  %v2093 = vpack.c.b16 %v2045, %v2041
  %v2094 = vpack.c.b16 %v2050, %v2046
  %v2095 = vpack.c.b16 %v2051, %v2047
  %v2096 = vpack.c.b16 %v2052, %v2048
  %v2097 = vpack.c.b16 %v2053, %v2049
  %v2098 = vpack.c.b16 %v2058, %v2054
  %v2099 = vpack.c.b16 %v2059, %v2055
  %v2100 = vpack.c.b16 %v2060, %v2056
  %v2101 = vpack.c.b16 %v2061, %v2057
  %v2102 = vpack.c.b16 %v2066, %v2062
  %v2103 = vpack.c.b16 %v2067, %v2063
  %v2104 = vpack.c.b16 %v2068, %v2064
  %v2105 = vpack.c.b16 %v2069, %v2065
  %v2106 = vpack.c.b16 %v2074, %v2070
  %v2107 = vpack.c.b16 %v2075, %v2071
  %v2108 = vpack.c.b16 %v2076, %v2072
  %v2109 = vpack.c.b16 %v2077, %v2073
  %2142 = vmatpush.bf16.msra.mxu0 %v2106
  %2143 = vmatpush.bf16.msra.mxu0 %v2102
  %2144 = vmatpush.bf16.msra.mxu0 %v2098
  %2145 = vmatpush.bf16.msra.mxu0 %v2094
  %2146 = vmatpush.bf16.msra.mxu0 %v2090
  %2147 = vmatpush.bf16.msra.mxu0 %v2086
  %2148 = vmatpush.bf16.msra.mxu0 %v2082
  %2149 = vmatpush.bf16.msra.mxu0 %v2078
  %2150 = vmatmul.bf16.gmra.mxu0 %v1949
  %v2151 = vpop.f32.mrf.mxu0
  %v2152 = vadd.f32 0.0, %v2151
  %v2153 = vpop.f32.mrf.mxu0
  %2154 = vdwg.mxu0
  %2155 = vmatpush.bf16.msra.mxu0 %v2107
  %2156 = vmatpush.bf16.msra.mxu0 %v2103
  %2157 = vmatpush.bf16.msra.mxu0 %v2099
  %2158 = vmatpush.bf16.msra.mxu0 %v2095
  %2159 = vmatpush.bf16.msra.mxu0 %v2091
  %2160 = vmatpush.bf16.msra.mxu0 %v2087
  %2161 = vmatpush.bf16.msra.mxu0 %v2083
  %2162 = vmatpush.bf16.msra.mxu0 %v2079
  %2163 = vmatmul.bf16.gmra.mxu0 %v1949
  %v2164 = vpop.f32.mrf.mxu0
  %v2165 = vadd.f32 0.0, %v2164
  %v2166 = vpop.f32.mrf.mxu0
  %2167 = vdwg.mxu0
  %2168 = vmatpush.bf16.msra.mxu0 %v2108
  %2169 = vmatpush.bf16.msra.mxu0 %v2104
  %2170 = vmatpush.bf16.msra.mxu0 %v2100
  %2171 = vmatpush.bf16.msra.mxu0 %v2096
  %2172 = vmatpush.bf16.msra.mxu0 %v2092
  %2173 = vmatpush.bf16.msra.mxu0 %v2088
  %2174 = vmatpush.bf16.msra.mxu0 %v2084
  %2175 = vmatpush.bf16.msra.mxu0 %v2080
  %2176 = vmatmul.bf16.gmra.mxu0 %v1949
  %v2177 = vpop.f32.mrf.mxu0
  %v2178 = vadd.f32 0.0, %v2177
  %v2179 = vpop.f32.mrf.mxu0
  %2180 = vdwg.mxu0
  %2181 = vmatpush.bf16.msra.mxu0 %v2109
  %2182 = vmatpush.bf16.msra.mxu0 %v2105
  %2183 = vmatpush.bf16.msra.mxu0 %v2101
  %2184 = vmatpush.bf16.msra.mxu0 %v2097
  %2185 = vmatpush.bf16.msra.mxu0 %v2093
  %2186 = vmatpush.bf16.msra.mxu0 %v2089
  %2187 = vmatpush.bf16.msra.mxu0 %v2085
  %2188 = vmatpush.bf16.msra.mxu0 %v2081
  %2189 = vmatmul.bf16.gmra.mxu0 %v1949
  %v2190 = vpop.f32.mrf.mxu0
  %v2191 = vadd.f32 0.0, %v2190
  %v2192 = vpop.f32.mrf.mxu0
  %2193 = vdwg.mxu0
  %v2194 = vadd.f32 %v1944, %v2152
  %v2195 = vadd.f32 %v1945, %v2165
  %v2196 = vadd.f32 %v1946, %v2178
  %v2197 = vadd.f32 %v1947, %v2191
  %v2198 = vtanh.pop %v2194
  %v2199 = vtanh.pop %v2195
  %v2200 = vtanh.pop %v2196
  %v2201 = vtanh.pop %v2197
  %v2202 = vmul.f32 %v2198, 0.5
  %v2203 = vmul.f32 %v2199, 0.5
  %v2204 = vmul.f32 %v2200, 0.5
  %v2205 = vadd.f32 %v2202, 0.5
  %v2206 = vadd.f32 %v2203, 0.5
  %v2207 = vadd.f32 %v2204, 0.5
  %v2208 = vld [vmem:[#allocation2] sm:$0xff]
  %v2209 = vmul.f32 %v2206, %v2208
  %v2210 = vmul.f32 %v2205, %v2201
  %v2211 = vadd.f32 %v2209, %v2210
  %2212 = vst [vmem:[#allocation2] sm:$0xff] %v2211
  %v2213 = vtanh.pop %v2211
  %v2214 = vmul.f32 %v2207, %v2213
  %2215 = vst [vmem:[%s2] sm:$0xff] %v2214
  // Predicated region
  $region14: #{lstm_model_forward.1} parent=0 // pred_check
    _
  $region15: #{lstm_model_forward.1} parent=0 // pred_check_branch
    %2217 = sbr.rel (0) target = $region17
  $region16: #{lstm_model_forward.1} parent=0 // pred_region
    _
  $region17: #{lstm_model_forward.1} parent=0 // pred_fallthru
    _
  // Predicated region
  $region18: #{lstm_model_forward.1} parent=0 // pred_check
    _
  $region19: #{lstm_model_forward.1} parent=0 // pred_check_branch
    %2219 = sbr.rel (0) target = $region21
  $region20: #{lstm_model_forward.1} parent=0 // pred_region
    _
  $region21: #{lstm_model_forward.1} parent=0 // pred_fallthru
    _

</llo_original>
